<compile_context>
chip_gen: v7x
topology: tpu7x:2x2x1
jax: 0.10.0
libtpu: 0.0.40
codegen_flags: <defaults>
</compile_context>

<pallas_src>
import functools

import jax
import jax.numpy as jnp
from jax import lax
from jax.experimental import pallas as pl
from jax.experimental.pallas import tpu as pltpu

NEG_SLOPE = 0.01            # nn.LeakyReLU default
BN_EPS = 1e-5               # nn.BatchNorm1d default
_VMEM_LIMIT = 32 * 1024 * 1024      # explicit scoped-VMEM cap (fits v5e/v6e/v7x physical)
_STREAM_BUDGET = 8 * 1024 * 1024    # target double-buffered per-step streaming footprint
_MAX_TL = 8192


def _round_up(a, b):
    return (a + b - 1) // b * b


def _plan_tiles(l, n, bytes_per_lane):
    """Pick (tl, nl): largest lane tile (multiple of 128) whose double-buffered per-step
    footprint fits the streaming budget, minimizing padding of L."""
    tl_cap = max(128, min((_STREAM_BUDGET // (2 * bytes_per_lane)) // 128 * 128, _MAX_TL))
    l128 = _round_up(l, 128)
    if l128 <= tl_cap:
        tl, nl = l128, 1
    else:
        nl = -(-l // tl_cap)
        tl = _round_up(-(-l // nl), 128)
    # keep >= 2 grid steps so both v7x TensorCores get work even when N == 1
    if n == 1 and nl == 1 and l128 >= 256:
        nl = 2
        tl = _round_up(-(-l // 2), 128)
    return tl, nl


# --------------------------------------------------------------------------- kernels
def _stats_kernel(g_ref, x_ref, wg_ref, wx_ref, o_ref):
    """Accumulate per-channel sum / sum-of-squares of the bias-free 1x1 convs.
    Output block is resident across the L axis (one writeback per batch index).
    Zero-padded lanes of g/x contribute exactly zero, so no masking is needed here."""
    @pl.when(pl.program_id(1) == 0)
    def _():
        o_ref[...] = jnp.zeros_like(o_ref)

    cg = jnp.dot(wg_ref[...], g_ref[0], preferred_element_type=jnp.float32)  # (F_int, TL)
    cx = jnp.dot(wx_ref[...], x_ref[0], preferred_element_type=jnp.float32)  # (F_int, TL)
    part = jnp.concatenate(
        [jnp.sum(cg, axis=1, keepdims=True),
         jnp.sum(cg * cg, axis=1, keepdims=True),
         jnp.sum(cx, axis=1, keepdims=True),
         jnp.sum(cx * cx, axis=1, keepdims=True)],
        axis=1,
    )                                                                        # (F_int, 4)
    o_ref[...] = o_ref[...] + part[None]


def _psi_kernel(g_ref, x_ref, wg_ref, wx_ref, c_ref, wp_ref, bp_ref, p_ref, pstat_ref,
                *, tl, l_valid, need_mask):
    """a = LeakyReLU(BN(conv_g)+BN(conv_x)) with BN folded into the conv weights;
    p = conv_psi(a) (pre-BN) via VPU broadcast-mul + sublane reduce.  Emits p and
    accumulates its batch stats (padded lanes masked out)."""
    j = pl.program_id(1)

    @pl.when(j == 0)
    def _():
        pstat_ref[...] = jnp.zeros_like(pstat_ref)

    pre = (jnp.dot(wg_ref[...], g_ref[0], preferred_element_type=jnp.float32)
           + jnp.dot(wx_ref[...], x_ref[0], preferred_element_type=jnp.float32)
           + c_ref[...])                                                     # (F_int, TL)
    a = jnp.where(pre >= 0, pre, NEG_SLOPE * pre)
    # 1-row "conv": VPU broadcast-multiply + sublane reduction (keeps the MXU free).
    p = jnp.sum(wp_ref[...] * a, axis=0, keepdims=True) + bp_ref[...]        # (1, TL)
    p_ref[0] = p

    if need_mask:
        lane = lax.broadcasted_iota(jnp.int32, (1, tl), 1) + j * tl
        pm = jnp.where(lane < l_valid, p, 0.0)
    else:
        pm = p
    pstat_ref[...] = pstat_ref[...] + jnp.concatenate(
        [jnp.sum(pm, axis=1, keepdims=True),
         jnp.sum(pm * pm, axis=1, keepdims=True)],
        axis=1,
    )[None]                                                                  # (1, 1, 2)


def _apply_kernel(coef_ref, x_ref, p_ref, o_ref):
    """out = x * sigmoid(scale * p + shift); lane-dense store in NCL layout."""
    z = p_ref[0] * coef_ref[0] + coef_ref[1]                                 # (1, TL)
    psi = jax.nn.sigmoid(z)
    o_ref[0] = (x_ref[0].astype(jnp.float32) * psi).astype(o_ref.dtype)      # (F_l, TL)


# --------------------------------------------------------------------------- wrapper
@jax.jit
def attention_block_forward(g, x, wg, bg, wx, bx, wp, bp,
                            gamma_g, beta_g, gamma_x, beta_x, gamma_p, beta_p):
    """g: (N, F_g, L), x: (N, F_l, L); conv weights in PyTorch (out, in, 1) layout."""
    f32 = jnp.float32
    n, f_g, l = g.shape
    f_l = x.shape[1]
    f_int = wg.shape[0]
    out_dtype = x.dtype

    sz_g = g.dtype.itemsize
    sz_x = x.dtype.itemsize
    bytes_per_lane = max(f_g * sz_g + f_l * sz_x + 4,        # passes 1-2: g, x, psi_pre
                         f_l * sz_x + 4 + f_l * sz_x)        # pass 3: x, psi_pre, out
    tl, nl = _plan_tiles(l, n, bytes_per_lane)
    l_pad = tl * nl
    if l_pad != l:                                           # zero-pad L to a tile multiple
        g = jnp.pad(g, ((0, 0), (0, 0), (0, l_pad - l)))
        x = jnp.pad(x, ((0, 0), (0, 0), (0, l_pad - l)))
    m = n * l                                                # true element count for BN
    grid = (n, nl)

    cp_acc = pltpu.CompilerParams(dimension_semantics=("parallel", "arbitrary"),
                                  vmem_limit_bytes=_VMEM_LIMIT)
    cp_par = pltpu.CompilerParams(dimension_semantics=("parallel", "parallel"),
                                  vmem_limit_bytes=_VMEM_LIMIT)

    # g / x stream in their native dtype; only the tiny weights are promoted to f32.
    wg2 = wg.reshape(f_int, f_g).astype(f32)
    wx2 = wx.reshape(f_int, f_l).astype(f32)
    wp_col = wp.reshape(f_int, 1).astype(f32)

    # ---------------- pass 1: batch statistics of conv_g / conv_x -----------------
    stats = pl.pallas_call(
        _stats_kernel,
        out_shape=jax.ShapeDtypeStruct((n, f_int, 4), f32),
        grid=grid,
        in_specs=[
            pl.BlockSpec((1, f_g, tl), lambda i, j: (i, 0, j)),
            pl.BlockSpec((1, f_l, tl), lambda i, j: (i, 0, j)),
            pl.BlockSpec((f_int, f_g), lambda i, j: (0, 0)),
            pl.BlockSpec((f_int, f_l), lambda i, j: (0, 0)),
        ],
        out_specs=pl.BlockSpec((1, f_int, 4), lambda i, j: (i, 0, 0)),
        compiler_params=cp_acc,
    )(g, x, wg2, wx2)

    s = jnp.sum(stats, axis=0)                               # (F_int, 4) tiny finalize
    mean_g0 = s[:, 0] / m                                    # mean of bias-free conv_g
    var_g = jnp.maximum(s[:, 1] / m - mean_g0 * mean_g0, 0.0)
    mean_x0 = s[:, 2] / m
    var_x = jnp.maximum(s[:, 3] / m - mean_x0 * mean_x0, 0.0)

    scale_g = gamma_g.astype(f32) * lax.rsqrt(var_g + BN_EPS)
    scale_x = gamma_x.astype(f32) * lax.rsqrt(var_x + BN_EPS)
    shift_g = beta_g.astype(f32) - scale_g * mean_g0         # conv bias cancels inside BN
    shift_x = beta_x.astype(f32) - scale_x * mean_x0

    wg_eff = scale_g[:, None] * wg2                          # BN affine folded into conv
    wx_eff = scale_x[:, None] * wx2
    c_gx = (shift_g + shift_x)[:, None]                      # (F_int, 1)
    bp2 = bp.astype(f32).reshape(1, 1)

    # ---------------- pass 2: psi pre-activation + its batch statistics -----------
    psi_kernel = functools.partial(_psi_kernel, tl=tl, l_valid=l, need_mask=(l_pad != l))
    psi_pre, pstats = pl.pallas_call(
        psi_kernel,
        out_shape=(jax.ShapeDtypeStruct((n, 1, l_pad), f32),
                   jax.ShapeDtypeStruct((n, 1, 2), f32)),
        grid=grid,
        in_specs=[
            pl.BlockSpec((1, f_g, tl), lambda i, j: (i, 0, j)),
            pl.BlockSpec((1, f_l, tl), lambda i, j: (i, 0, j)),
            pl.BlockSpec((f_int, f_g), lambda i, j: (0, 0)),
            pl.BlockSpec((f_int, f_l), lambda i, j: (0, 0)),
            pl.BlockSpec((f_int, 1), lambda i, j: (0, 0)),
            pl.BlockSpec((f_int, 1), lambda i, j: (0, 0)),
            pl.BlockSpec((1, 1), lambda i, j: (0, 0)),
        ],
        out_specs=(
            pl.BlockSpec((1, 1, tl), lambda i, j: (i, 0, j)),
            pl.BlockSpec((1, 1, 2), lambda i, j: (i, 0, 0)),
        ),
        compiler_params=cp_acc,
    )(g, x, wg_eff, wx_eff, c_gx, wp_col, bp2)

    ps = jnp.sum(pstats, axis=0)                             # (1, 2)
    mean_p = ps[0, 0] / m
    var_p = jnp.maximum(ps[0, 1] / m - mean_p * mean_p, 0.0)
    scale_p = gamma_p.astype(f32)[0] * lax.rsqrt(var_p + BN_EPS)
    shift_p = beta_p.astype(f32)[0] - mean_p * scale_p
    coef = jnp.stack([scale_p, shift_p]).astype(f32)         # (2,) scalars -> SMEM

    # ---------------- pass 3: out = x * sigmoid(BN(psi_pre)) ----------------------
    out = pl.pallas_call(
        _apply_kernel,
        out_shape=jax.ShapeDtypeStruct((n, f_l, l_pad), out_dtype),
        grid=grid,
        in_specs=[
            pl.BlockSpec(memory_space=pltpu.MemorySpace.SMEM),
            pl.BlockSpec((1, f_l, tl), lambda i, j: (i, 0, j)),
            pl.BlockSpec((1, 1, tl), lambda i, j: (i, 0, j)),
        ],
        out_specs=pl.BlockSpec((1, f_l, tl), lambda i, j: (i, 0, j)),
        compiler_params=cp_par,
    )(coef, x, psi_pre)

    if l_pad != l:
        out = out[:, :, :l]
    return out


# --------------------------------------------------------------------------- reference
def _reference_forward(g, x, wg, bg, wx, bx, wp, bp,
                       gamma_g, beta_g, gamma_x, beta_x, gamma_p, beta_p):
    """Pure-JAX replica of the PyTorch forward (training-mode BatchNorm)."""
    def conv1(w, b, t):
        w2 = w.reshape(w.shape[0], w.shape[1]).astype(jnp.float32)
        return jnp.einsum("oi,nil->nol", w2, t.astype(jnp.float32)) + b[None, :, None]

    def bn(t, gamma, beta):
        mean = jnp.mean(t, axis=(0, 2), keepdims=True)
        var = jnp.mean((t - mean) ** 2, axis=(0, 2), keepdims=True)   # biased
        return (t - mean) * lax.rsqrt(var + BN_EPS) * gamma[None, :, None] + beta[None, :, None]

    g1 = bn(conv1(wg, bg, g), gamma_g, beta_g)
    x1 = bn(conv1(wx, bx, x), gamma_x, beta_x)
    s = g1 + x1
    a = jnp.where(s >= 0, s, NEG_SLOPE * s)
    p = bn(conv1(wp, bp, a), gamma_p, beta_p)
    psi = jax.nn.sigmoid(p)
    return x.astype(jnp.float32) * psi


if __name__ == "__main__":
    def run_case(n, f_g, f_l, f_int, l):
        key = jax.random.PRNGKey(0)
        ks = jax.random.split(key, 14)
        g = jax.random.normal(ks[0], (n, f_g, l), dtype=jnp.float32)
        x = jax.random.normal(ks[1], (n, f_l, l), dtype=jnp.float32)
        wg = 0.3 * jax.random.normal(ks[2], (f_int, f_g, 1), dtype=jnp.float32)
        bg = 0.1 * jax.random.normal(ks[3], (f_int,), dtype=jnp.float32)
        wx = 0.3 * jax.random.normal(ks[4], (f_int, f_l, 1), dtype=jnp.float32)
        bx = 0.1 * jax.random.normal(ks[5], (f_int,), dtype=jnp.float32)
        wp = 0.3 * jax.random.normal(ks[6], (1, f_int, 1), dtype=jnp.float32)
        bp = 0.1 * jax.random.normal(ks[7], (1,), dtype=jnp.float32)
        gamma_g = 1.0 + 0.1 * jax.random.normal(ks[8], (f_int,), dtype=jnp.float32)
        beta_g = 0.1 * jax.random.normal(ks[9], (f_int,), dtype=jnp.float32)
        gamma_x = 1.0 + 0.1 * jax.random.normal(ks[10], (f_int,), dtype=jnp.float32)
        beta_x = 0.1 * jax.random.normal(ks[11], (f_int,), dtype=jnp.float32)
        gamma_p = 1.0 + 0.1 * jax.random.normal(ks[12], (1,), dtype=jnp.float32)
        beta_p = 0.1 * jax.random.normal(ks[13], (1,), dtype=jnp.float32)

        out = attention_block_forward(g, x, wg, bg, wx, bx, wp, bp,
                                      gamma_g, beta_g, gamma_x, beta_x, gamma_p, beta_p)
        out = jax.block_until_ready(out)
        ref = _reference_forward(g, x, wg, bg, wx, bx, wp, bp,
                                 gamma_g, beta_g, gamma_x, beta_x, gamma_p, beta_p)
        assert out.shape == (n, f_l, l), out.shape
        max_err = float(jnp.max(jnp.abs(out - ref)))
        assert jnp.allclose(out, ref, atol=1e-4, rtol=1e-4), max_err

    # Case 1: non-128-multiple L -> padded/masked path, single large L tile, grid (2, 1).
    run_case(2, 4, 4, 8, 1000)
    # Case 2: N=1 -> forced L split (nl=2) for megacore occupancy, multi-tile stats
    # accumulation, padded/masked path, F_g != F_l.
    run_case(1, 4, 6, 8, 300)

    print("KERNEL_OK")
</pallas_src>

<mosaic_0001>
module attributes {stable_mosaic.version = 11 : i64} {
  func.func @_stats_kernel(%arg0: i32, %arg1: i32, %arg2: memref<1x4x1024xf32, #tpu.memory_space<vmem>>, %arg3: memref<1x4x1024xf32, #tpu.memory_space<vmem>>, %arg4: memref<8x4xf32, #tpu.memory_space<vmem>>, %arg5: memref<8x4xf32, #tpu.memory_space<vmem>>, %arg6: memref<1x8x4xf32, #tpu.memory_space<vmem>>) attributes {dimension_semantics = [#tpu.dimension_semantics<parallel>, #tpu.dimension_semantics<arbitrary>], iteration_bounds = array<i64: 2, 1>, scalar_prefetch = 0 : i64, scratch_operands = 0 : i64, tpu.core_type = #tpu.core_type<tc>, window_params = [{transform_indices = @transform_0, window_bounds = array<i64: 1, 4, 1024>}, {transform_indices = @transform_1, window_bounds = array<i64: 1, 4, 1024>}, {pipeline_mode = #tpu.pipeline_mode<synchronous>, transform_indices = @transform_2, window_bounds = array<i64: 8, 4>}, {pipeline_mode = #tpu.pipeline_mode<synchronous>, transform_indices = @transform_3, window_bounds = array<i64: 8, 4>}, {transform_indices = @transform_4, window_bounds = array<i64: 1, 8, 4>}]} {
    %c0_i32 = arith.constant 0 : i32
    %0 = arith.cmpi eq, %arg1, %c0_i32 : i32
    %1 = arith.extui %0 : i1 to i32
    %c0_i32_0 = arith.constant 0 : i32
    %2 = arith.cmpi ne, %1, %c0_i32_0 : i32
    scf.if %2 {
      %cst_21 = arith.constant 0.000000e+00 : f32
      %26 = vector.broadcast %cst_21 : f32 to vector<1x8x4xf32>
      %c0_22 = arith.constant 0 : index
      %c0_23 = arith.constant 0 : index
      %c0_24 = arith.constant 0 : index
      %27 = vector.load %arg6[%c0_22, %c0_23, %c0_24] : memref<1x8x4xf32, #tpu.memory_space<vmem>>, vector<1x8x4xf32>
      tpu.vector_store %arg6[%c0_22, %c0_23, %c0_24], %26 {strides = array<i32>} : memref<1x8x4xf32, #tpu.memory_space<vmem>>, vector<1x8x4xf32>,
    } else {
    }
    %c0 = arith.constant 0 : index
    %c0_1 = arith.constant 0 : index
    %3 = vector.load %arg4[%c0, %c0_1] : memref<8x4xf32, #tpu.memory_space<vmem>>, vector<8x4xf32>
    %c0_2 = arith.constant 0 : index
    %c0_3 = arith.constant 0 : index
    %c0_4 = arith.constant 0 : index
    %4 = vector.load %arg2[%c0_2, %c0_3, %c0_4] : memref<1x4x1024xf32, #tpu.memory_space<vmem>>, vector<1x4x1024xf32>
    %5 = vector.shape_cast %4 : vector<1x4x1024xf32> to vector<4x1024xf32>
    %cst = arith.constant dense<0.000000e+00> : vector<8x1024xf32>
    %6 = tpu.matmul %3, %5, %cst {dimension_numbers = #tpu.dot_dimension_numbers<[1], [0], [0], [1], [0, 0, 1, 1], [], []>} : vector<8x4xf32>, vector<4x1024xf32>, vector<8x1024xf32> -> vector<8x1024xf32>
    %c0_5 = arith.constant 0 : index
    %c0_6 = arith.constant 0 : index
    %7 = vector.load %arg5[%c0_5, %c0_6] : memref<8x4xf32, #tpu.memory_space<vmem>>, vector<8x4xf32>
    %c0_7 = arith.constant 0 : index
    %c0_8 = arith.constant 0 : index
    %c0_9 = arith.constant 0 : index
    %8 = vector.load %arg3[%c0_7, %c0_8, %c0_9] : memref<1x4x1024xf32, #tpu.memory_space<vmem>>, vector<1x4x1024xf32>
    %9 = vector.shape_cast %8 : vector<1x4x1024xf32> to vector<4x1024xf32>
    %cst_10 = arith.constant dense<0.000000e+00> : vector<8x1024xf32>
    %10 = tpu.matmul %7, %9, %cst_10 {dimension_numbers = #tpu.dot_dimension_numbers<[1], [0], [0], [1], [0, 0, 1, 1], [], []>} : vector<8x4xf32>, vector<4x1024xf32>, vector<8x1024xf32> -> vector<8x1024xf32>
    %cst_11 = arith.constant dense<0.000000e+00> : vector<8xf32>
    %11 = vector.multi_reduction <add>, %6, %cst_11 [1] : vector<8x1024xf32> to vector<8xf32>
    %12 = vector.shape_cast %11 : vector<8xf32> to vector<8x1xf32>
    %13 = arith.mulf %6, %6 : vector<8x1024xf32>
    %cst_12 = arith.constant dense<0.000000e+00> : vector<8xf32>
    %14 = vector.multi_reduction <add>, %13, %cst_12 [1] : vector<8x1024xf32> to vector<8xf32>
    %15 = vector.shape_cast %14 : vector<8xf32> to vector<8x1xf32>
    %cst_13 = arith.constant dense<0.000000e+00> : vector<8xf32>
    %16 = vector.multi_reduction <add>, %10, %cst_13 [1] : vector<8x1024xf32> to vector<8xf32>
    %17 = vector.shape_cast %16 : vector<8xf32> to vector<8x1xf32>
    %18 = arith.mulf %10, %10 : vector<8x1024xf32>
    %cst_14 = arith.constant dense<0.000000e+00> : vector<8xf32>
    %19 = vector.multi_reduction <add>, %18, %cst_14 [1] : vector<8x1024xf32> to vector<8xf32>
    %20 = vector.shape_cast %19 : vector<8xf32> to vector<8x1xf32>
    %21 = tpu.concatenate %12, %15, %17, %20 in 1 : vector<8x1xf32>, vector<8x1xf32>, vector<8x1xf32>, vector<8x1xf32> -> vector<8x4xf32>
    %c0_15 = arith.constant 0 : index
    %c0_16 = arith.constant 0 : index
    %c0_17 = arith.constant 0 : index
    %22 = vector.load %arg6[%c0_15, %c0_16, %c0_17] : memref<1x8x4xf32, #tpu.memory_space<vmem>>, vector<1x8x4xf32>
    %23 = vector.shape_cast %21 : vector<8x4xf32> to vector<1x8x4xf32>
    %24 = arith.addf %22, %23 : vector<1x8x4xf32>
    %c0_18 = arith.constant 0 : index
    %c0_19 = arith.constant 0 : index
    %c0_20 = arith.constant 0 : index
    %25 = vector.load %arg6[%c0_18, %c0_19, %c0_20] : memref<1x8x4xf32, #tpu.memory_space<vmem>>, vector<1x8x4xf32>
    tpu.vector_store %arg6[%c0_18, %c0_19, %c0_20], %24 {strides = array<i32>} : memref<1x8x4xf32, #tpu.memory_space<vmem>>, vector<1x8x4xf32>,
    return
  }
  func.func @transform_0(%arg0: i32, %arg1: i32) -> (i32, i32, i32) {
    %c0_i32 = arith.constant 0 : i32
    %c0_i32_0 = arith.constant 0 : i32
    return %arg0, %c0_i32, %arg1 : i32, i32, i32
  }
  func.func @transform_1(%arg0: i32, %arg1: i32) -> (i32, i32, i32) {
    %c0_i32 = arith.constant 0 : i32
    %c0_i32_0 = arith.constant 0 : i32
    return %arg0, %c0_i32, %arg1 : i32, i32, i32
  }
  func.func @transform_2(%arg0: i32, %arg1: i32) -> (i32, i32) {
    %c0_i32 = arith.constant 0 : i32
    %c0_i32_0 = arith.constant 0 : i32
    %c0_i32_1 = arith.constant 0 : i32
    return %c0_i32, %c0_i32_0 : i32, i32
  }
  func.func @transform_3(%arg0: i32, %arg1: i32) -> (i32, i32) {
    %c0_i32 = arith.constant 0 : i32
    %c0_i32_0 = arith.constant 0 : i32
    %c0_i32_1 = arith.constant 0 : i32
    return %c0_i32, %c0_i32_0 : i32, i32
  }
  func.func @transform_4(%arg0: i32, %arg1: i32) -> (i32, i32, i32) {
    %c0_i32 = arith.constant 0 : i32
    %c0_i32_0 = arith.constant 0 : i32
    %c0_i32_1 = arith.constant 0 : i32
    return %arg0, %c0_i32, %c0_i32_0 : i32, i32, i32
  }
}

module attributes {stable_mosaic.version = 11 : i64} {
  func.func @_psi_kernel(%arg0: i32, %arg1: i32, %arg2: memref<1x4x1024xf32, #tpu.memory_space<vmem>>, %arg3: memref<1x4x1024xf32, #tpu.memory_space<vmem>>, %arg4: memref<8x4xf32, #tpu.memory_space<vmem>>, %arg5: memref<8x4xf32, #tpu.memory_space<vmem>>, %arg6: memref<8x1xf32, #tpu.memory_space<vmem>>, %arg7: memref<8x1xf32, #tpu.memory_space<vmem>>, %arg8: memref<1x1xf32, #tpu.memory_space<vmem>>, %arg9: memref<1x1x1024xf32, #tpu.memory_space<vmem>>, %arg10: memref<1x1x2xf32, #tpu.memory_space<vmem>>) attributes {dimension_semantics = [#tpu.dimension_semantics<parallel>, #tpu.dimension_semantics<arbitrary>], iteration_bounds = array<i64: 2, 1>, scalar_prefetch = 0 : i64, scratch_operands = 0 : i64, tpu.core_type = #tpu.core_type<tc>, window_params = [{transform_indices = @transform_0, window_bounds = array<i64: 1, 4, 1024>}, {transform_indices = @transform_1, window_bounds = array<i64: 1, 4, 1024>}, {pipeline_mode = #tpu.pipeline_mode<synchronous>, transform_indices = @transform_2, window_bounds = array<i64: 8, 4>}, {pipeline_mode = #tpu.pipeline_mode<synchronous>, transform_indices = @transform_3, window_bounds = array<i64: 8, 4>}, {pipeline_mode = #tpu.pipeline_mode<synchronous>, transform_indices = @transform_4, window_bounds = array<i64: 8, 1>}, {pipeline_mode = #tpu.pipeline_mode<synchronous>, transform_indices = @transform_5, window_bounds = array<i64: 8, 1>}, {pipeline_mode = #tpu.pipeline_mode<synchronous>, transform_indices = @transform_6, window_bounds = array<i64: 1, 1>}, {transform_indices = @transform_7, window_bounds = array<i64: 1, 1, 1024>}, {transform_indices = @transform_8, window_bounds = array<i64: 1, 1, 2>}]} {
    %c0_i32 = arith.constant 0 : i32
    %0 = arith.cmpi eq, %arg1, %c0_i32 : i32
    %1 = arith.extui %0 : i1 to i32
    %c0_i32_0 = arith.constant 0 : i32
    %2 = arith.cmpi ne, %1, %c0_i32_0 : i32
    scf.if %2 {
      %cst_32 = arith.constant 0.000000e+00 : f32
      %49 = vector.broadcast %cst_32 : f32 to vector<1x1x2xf32>
      %c0_33 = arith.constant 0 : index
      %c0_34 = arith.constant 0 : index
      %c0_35 = arith.constant 0 : index
      %50 = vector.load %arg10[%c0_33, %c0_34, %c0_35] : memref<1x1x2xf32, #tpu.memory_space<vmem>>, vector<1x1x2xf32>
      tpu.vector_store %arg10[%c0_33, %c0_34, %c0_35], %49 {strides = array<i32>} : memref<1x1x2xf32, #tpu.memory_space<vmem>>, vector<1x1x2xf32>,
    } else {
    }
    %c0 = arith.constant 0 : index
    %c0_1 = arith.constant 0 : index
    %3 = vector.load %arg4[%c0, %c0_1] : memref<8x4xf32, #tpu.memory_space<vmem>>, vector<8x4xf32>
    %c0_2 = arith.constant 0 : index
    %c0_3 = arith.constant 0 : index
    %c0_4 = arith.constant 0 : index
    %4 = vector.load %arg2[%c0_2, %c0_3, %c0_4] : memref<1x4x1024xf32, #tpu.memory_space<vmem>>, vector<1x4x1024xf32>
    %5 = vector.shape_cast %4 : vector<1x4x1024xf32> to vector<4x1024xf32>
    %cst = arith.constant dense<0.000000e+00> : vector<8x1024xf32>
    %6 = tpu.matmul %3, %5, %cst {dimension_numbers = #tpu.dot_dimension_numbers<[1], [0], [0], [1], [0, 0, 1, 1], [], []>} : vector<8x4xf32>, vector<4x1024xf32>, vector<8x1024xf32> -> vector<8x1024xf32>
    %c0_5 = arith.constant 0 : index
    %c0_6 = arith.constant 0 : index
    %7 = vector.load %arg5[%c0_5, %c0_6] : memref<8x4xf32, #tpu.memory_space<vmem>>, vector<8x4xf32>
    %c0_7 = arith.constant 0 : index
    %c0_8 = arith.constant 0 : index
    %c0_9 = arith.constant 0 : index
    %8 = vector.load %arg3[%c0_7, %c0_8, %c0_9] : memref<1x4x1024xf32, #tpu.memory_space<vmem>>, vector<1x4x1024xf32>
    %9 = vector.shape_cast %8 : vector<1x4x1024xf32> to vector<4x1024xf32>
    %cst_10 = arith.constant dense<0.000000e+00> : vector<8x1024xf32>
    %10 = tpu.matmul %7, %9, %cst_10 {dimension_numbers = #tpu.dot_dimension_numbers<[1], [0], [0], [1], [0, 0, 1, 1], [], []>} : vector<8x4xf32>, vector<4x1024xf32>, vector<8x1024xf32> -> vector<8x1024xf32>
    %11 = arith.addf %6, %10 : vector<8x1024xf32>
    %c0_11 = arith.constant 0 : index
    %c0_12 = arith.constant 0 : index
    %12 = vector.load %arg6[%c0_11, %c0_12] : memref<8x1xf32, #tpu.memory_space<vmem>>, vector<8x1xf32>
    %13 = vector.broadcast %12 : vector<8x1xf32> to vector<8x1024xf32>
    %14 = arith.addf %11, %13 : vector<8x1024xf32>
    %cst_13 = arith.constant 0.000000e+00 : f32
    %15 = vector.broadcast %cst_13 : f32 to vector<8x1024xf32>
    %16 = arith.cmpf oge, %14, %15 : vector<8x1024xf32>
    %cst_14 = arith.constant 0.00999999977 : f32
    %17 = vector.broadcast %cst_14 : f32 to vector<8x1024xf32>
    %18 = arith.mulf %17, %14 : vector<8x1024xf32>
    %19 = arith.select %16, %14, %18 : vector<8x1024xi1>, vector<8x1024xf32>
    %c0_15 = arith.constant 0 : index
    %c0_16 = arith.constant 0 : index
    %20 = vector.load %arg7[%c0_15, %c0_16] : memref<8x1xf32, #tpu.memory_space<vmem>>, vector<8x1xf32>
    %21 = vector.broadcast %20 : vector<8x1xf32> to vector<8x1024xf32>
    %22 = arith.mulf %21, %19 : vector<8x1024xf32>
    %cst_17 = arith.constant dense<0.000000e+00> : vector<1024xf32>
    %23 = vector.multi_reduction <add>, %22, %cst_17 [0] : vector<8x1024xf32> to vector<1024xf32>
    %24 = vector.shape_cast %23 : vector<1024xf32> to vector<1x1024xf32>
    %c0_18 = arith.constant 0 : index
    %c0_19 = arith.constant 0 : index
    %25 = vector.load %arg8[%c0_18, %c0_19] : memref<1x1xf32, #tpu.memory_space<vmem>>, vector<1x1xf32>
    %26 = vector.broadcast %25 : vector<1x1xf32> to vector<1x1024xf32>
    %27 = arith.addf %24, %26 : vector<1x1024xf32>
    %c0_20 = arith.constant 0 : index
    %c0_21 = arith.constant 0 : index
    %c0_22 = arith.constant 0 : index
    %28 = vector.load %arg9[%c0_20, %c0_21, %c0_22] : memref<1x1x1024xf32, #tpu.memory_space<vmem>>, vector<1x1x1024xf32>
    %29 = vector.shape_cast %28 : vector<1x1x1024xf32> to vector<1x1024xf32>
    %30 = vector.shape_cast %27 : vector<1x1024xf32> to vector<1x1x1024xf32>
    tpu.vector_store %arg9[%c0_20, %c0_21, %c0_22], %30 {strides = array<i32>} : memref<1x1x1024xf32, #tpu.memory_space<vmem>>, vector<1x1x1024xf32>,
    %31 = tpu.iota {dimensions = array<i32: 1>} : vector<1x1024xi32>
    %c1024_i32 = arith.constant 1024 : i32
    %32 = arith.muli %arg1, %c1024_i32 : i32
    %33 = vector.broadcast %32 : i32 to vector<1x1024xi32>
    %34 = arith.addi %31, %33 : vector<1x1024xi32>
    %c1000_i32 = arith.constant 1000 : i32
    %35 = vector.broadcast %c1000_i32 : i32 to vector<1x1024xi32>
    %36 = arith.cmpi slt, %34, %35 : vector<1x1024xi32>
    %cst_23 = arith.constant 0.000000e+00 : f32
    %37 = vector.broadcast %cst_23 : f32 to vector<1x1024xf32>
    %38 = arith.select %36, %27, %37 : vector<1x1024xi1>, vector<1x1024xf32>
    %c0_24 = arith.constant 0 : index
    %c0_25 = arith.constant 0 : index
    %c0_26 = arith.constant 0 : index
    %39 = vector.load %arg10[%c0_24, %c0_25, %c0_26] : memref<1x1x2xf32, #tpu.memory_space<vmem>>, vector<1x1x2xf32>
    %cst_27 = arith.constant dense<0.000000e+00> : vector<1xf32>
    %40 = vector.multi_reduction <add>, %38, %cst_27 [1] : vector<1x1024xf32> to vector<1xf32>
    %41 = vector.shape_cast %40 : vector<1xf32> to vector<1x1xf32>
    %42 = arith.mulf %38, %38 : vector<1x1024xf32>
    %cst_28 = arith.constant dense<0.000000e+00> : vector<1xf32>
    %43 = vector.multi_reduction <add>, %42, %cst_28 [1] : vector<1x1024xf32> to vector<1xf32>
    %44 = vector.shape_cast %43 : vector<1xf32> to vector<1x1xf32>
    %45 = tpu.concatenate %41, %44 in 1 : vector<1x1xf32>, vector<1x1xf32> -> vector<1x2xf32>
    %46 = vector.shape_cast %45 : vector<1x2xf32> to vector<1x1x2xf32>
    %47 = arith.addf %39, %46 : vector<1x1x2xf32>
    %c0_29 = arith.constant 0 : index
    %c0_30 = arith.constant 0 : index
    %c0_31 = arith.constant 0 : index
    %48 = vector.load %arg10[%c0_29, %c0_30, %c0_31] : memref<1x1x2xf32, #tpu.memory_space<vmem>>, vector<1x1x2xf32>
    tpu.vector_store %arg10[%c0_29, %c0_30, %c0_31], %47 {strides = array<i32>} : memref<1x1x2xf32, #tpu.memory_space<vmem>>, vector<1x1x2xf32>,
    return
  }
  func.func @transform_0(%arg0: i32, %arg1: i32) -> (i32, i32, i32) {
    %c0_i32 = arith.constant 0 : i32
    %c0_i32_0 = arith.constant 0 : i32
    return %arg0, %c0_i32, %arg1 : i32, i32, i32
  }
  func.func @transform_1(%arg0: i32, %arg1: i32) -> (i32, i32, i32) {
    %c0_i32 = arith.constant 0 : i32
    %c0_i32_0 = arith.constant 0 : i32
    return %arg0, %c0_i32, %arg1 : i32, i32, i32
  }
  func.func @transform_2(%arg0: i32, %arg1: i32) -> (i32, i32) {
    %c0_i32 = arith.constant 0 : i32
    %c0_i32_0 = arith.constant 0 : i32
    %c0_i32_1 = arith.constant 0 : i32
    return %c0_i32, %c0_i32_0 : i32, i32
  }
  func.func @transform_3(%arg0: i32, %arg1: i32) -> (i32, i32) {
    %c0_i32 = arith.constant 0 : i32
    %c0_i32_0 = arith.constant 0 : i32
    %c0_i32_1 = arith.constant 0 : i32
    return %c0_i32, %c0_i32_0 : i32, i32
  }
  func.func @transform_4(%arg0: i32, %arg1: i32) -> (i32, i32) {
    %c0_i32 = arith.constant 0 : i32
    %c0_i32_0 = arith.constant 0 : i32
    %c0_i32_1 = arith.constant 0 : i32
    return %c0_i32, %c0_i32_0 : i32, i32
  }
  func.func @transform_5(%arg0: i32, %arg1: i32) -> (i32, i32) {
    %c0_i32 = arith.constant 0 : i32
    %c0_i32_0 = arith.constant 0 : i32
    %c0_i32_1 = arith.constant 0 : i32
    return %c0_i32, %c0_i32_0 : i32, i32
  }
  func.func @transform_6(%arg0: i32, %arg1: i32) -> (i32, i32) {
    %c0_i32 = arith.constant 0 : i32
    %c0_i32_0 = arith.constant 0 : i32
    %c0_i32_1 = arith.constant 0 : i32
    return %c0_i32, %c0_i32_0 : i32, i32
  }
  func.func @transform_7(%arg0: i32, %arg1: i32) -> (i32, i32, i32) {
    %c0_i32 = arith.constant 0 : i32
    %c0_i32_0 = arith.constant 0 : i32
    return %arg0, %c0_i32, %arg1 : i32, i32, i32
  }
  func.func @transform_8(%arg0: i32, %arg1: i32) -> (i32, i32, i32) {
    %c0_i32 = arith.constant 0 : i32
    %c0_i32_0 = arith.constant 0 : i32
    %c0_i32_1 = arith.constant 0 : i32
    return %arg0, %c0_i32, %c0_i32_0 : i32, i32, i32
  }
}

module attributes {stable_mosaic.version = 11 : i64} {
  func.func @_apply_kernel(%arg0: i32, %arg1: i32, %arg2: memref<2xf32, #tpu.memory_space<smem>>, %arg3: memref<1x4x1024xf32, #tpu.memory_space<vmem>>, %arg4: memref<1x1x1024xf32, #tpu.memory_space<vmem>>, %arg5: memref<1x4x1024xf32, #tpu.memory_space<vmem>>) attributes {dimension_semantics = [#tpu.dimension_semantics<parallel>, #tpu.dimension_semantics<parallel>], iteration_bounds = array<i64: 2, 1>, scalar_prefetch = 0 : i64, scratch_operands = 0 : i64, tpu.core_type = #tpu.core_type<tc>, window_params = [{transform_indices = @transform_0, window_bounds = array<i64: 2>}, {transform_indices = @transform_1, window_bounds = array<i64: 1, 4, 1024>}, {transform_indices = @transform_2, window_bounds = array<i64: 1, 1, 1024>}, {transform_indices = @transform_3, window_bounds = array<i64: 1, 4, 1024>}]} {
    %c0 = arith.constant 0 : index
    %c0_0 = arith.constant 0 : index
    %c0_1 = arith.constant 0 : index
    %0 = vector.load %arg4[%c0, %c0_0, %c0_1] : memref<1x1x1024xf32, #tpu.memory_space<vmem>>, vector<1x1x1024xf32>
    %1 = vector.shape_cast %0 : vector<1x1x1024xf32> to vector<1x1024xf32>
    %c0_2 = arith.constant 0 : index
    %2 = memref.load %arg2[%c0_2] : memref<2xf32, #tpu.memory_space<smem>>
    %3 = vector.broadcast %2 : f32 to vector<1x1024xf32>
    %4 = arith.mulf %1, %3 : vector<1x1024xf32>
    %c1 = arith.constant 1 : index
    %5 = memref.load %arg2[%c1] : memref<2xf32, #tpu.memory_space<smem>>
    %6 = vector.broadcast %5 : f32 to vector<1x1024xf32>
    %7 = arith.addf %4, %6 : vector<1x1024xf32>
    %8 = arith.negf %7 : vector<1x1024xf32>
    %9 = math.exp %8 : vector<1x1024xf32>
    %cst = arith.constant 1.000000e+00 : f32
    %10 = vector.broadcast %cst : f32 to vector<1x1024xf32>
    %11 = arith.addf %10, %9 : vector<1x1024xf32>
    %12 = arith.divf %10, %11 : vector<1x1024xf32>
    %c0_3 = arith.constant 0 : index
    %c0_4 = arith.constant 0 : index
    %c0_5 = arith.constant 0 : index
    %13 = vector.load %arg3[%c0_3, %c0_4, %c0_5] : memref<1x4x1024xf32, #tpu.memory_space<vmem>>, vector<1x4x1024xf32>
    %14 = vector.shape_cast %13 : vector<1x4x1024xf32> to vector<4x1024xf32>
    %15 = vector.broadcast %12 : vector<1x1024xf32> to vector<4x1024xf32>
    %16 = arith.mulf %14, %15 : vector<4x1024xf32>
    %c0_6 = arith.constant 0 : index
    %c0_7 = arith.constant 0 : index
    %c0_8 = arith.constant 0 : index
    %17 = vector.load %arg5[%c0_6, %c0_7, %c0_8] : memref<1x4x1024xf32, #tpu.memory_space<vmem>>, vector<1x4x1024xf32>
    %18 = vector.shape_cast %17 : vector<1x4x1024xf32> to vector<4x1024xf32>
    %19 = vector.shape_cast %16 : vector<4x1024xf32> to vector<1x4x1024xf32>
    tpu.vector_store %arg5[%c0_6, %c0_7, %c0_8], %19 {strides = array<i32>} : memref<1x4x1024xf32, #tpu.memory_space<vmem>>, vector<1x4x1024xf32>,
    return
  }
  func.func @transform_0(%arg0: i32, %arg1: i32) -> i32 {
    %c0_i32 = arith.constant 0 : i32
    %c0_i32_0 = arith.constant 0 : i32
    return %c0_i32 : i32
  }
  func.func @transform_1(%arg0: i32, %arg1: i32) -> (i32, i32, i32) {
    %c0_i32 = arith.constant 0 : i32
    %c0_i32_0 = arith.constant 0 : i32
    return %arg0, %c0_i32, %arg1 : i32, i32, i32
  }
  func.func @transform_2(%arg0: i32, %arg1: i32) -> (i32, i32, i32) {
    %c0_i32 = arith.constant 0 : i32
    %c0_i32_0 = arith.constant 0 : i32
    return %arg0, %c0_i32, %arg1 : i32, i32, i32
  }
  func.func @transform_3(%arg0: i32, %arg1: i32) -> (i32, i32, i32) {
    %c0_i32 = arith.constant 0 : i32
    %c0_i32_0 = arith.constant 0 : i32
    return %arg0, %c0_i32, %arg1 : i32, i32, i32
  }
}

</mosaic_0001>

<llo_original>
// kernel: attention_block_forward.3
$region0: #{attention_block_forward.3}
  #allocation0 [shape = 'u32[]', space=smem, size = 0x4, offset = 0x4, fixed_abs, tag = 'smem constant byte address 0x4 - core index']
  #allocation1 [shape = 'u32[144,128]{1,0:T(1,128)}', space=vmem, size = 0x12000, scoped, tag = 'internal scratch']
  %s0 = inlined_call_operand.vmem [shape: f32[2,4,1024], index: 0, kind: input, shape index: {}]
  %s1 = inlined_call_operand.vmem [shape: f32[2,4,1024], index: 1, kind: input, shape index: {}]
  %s2 = inlined_call_operand.vmem [shape: f32[8,4], index: 2, kind: input, shape index: {}]
  %s3 = inlined_call_operand.vmem [shape: f32[8,4], index: 3, kind: input, shape index: {}]
  %s4 = inlined_call_operand.vmem [shape: f32[2,8,4], index: 4, kind: output, shape index: {}]
  %s5 = sld [smem:[#allocation0]]
  $region53: #{attention_block_forward.3} parent=0
    _
  %s7 = ssub.s32 1, %s5
  %s8 = scalar_select 0, %s7, %s5
  loop: start=0, step=1, limit=4
  $region2: #{attention_block_forward.3} parent=0 // loop_pre_header
    _
  $region3: #{attention_block_forward.3} parent=0 // loop_header
    %s10 = sphi 0, %s14
    %p11 = scmp.ge.s32.totalorder %s10, 4
    %s17 = sphi 0, %s29
    %s18 = sphi 0, %s25
    %s19 = sphi 0, %s17
    %s20 = sphi 0, %s18
    %s21 = sphi 0, %s19
    %s22 = sphi 0, %s20
    %s34 = sphi 0, %s36
    %s37 = sphi 0, %s34
    %s38 = sphi 0, %s37
    %s54 = sphi 0, %s38
    %s62 = sphi 0, %s64
    %s65 = sphi 0, %s62
    %s66 = sphi 0, %s65
    %s82 = sphi 0, %s66
    %s86 = sphi 0, %s86
    %s88 = sphi 0, %s86
    %s89 = sphi 0, %s88
    %s103 = sphi 0, %s89
    %s107 = sphi 0, %s107
    %s109 = sphi 0, %s107
    %s110 = sphi 0, %s109
    %s124 = sphi 0, %s110
    %s130 = sphi 0, %s132
    %s133 = sphi 0, %s130
    %s134 = sphi 0, %s133
    %s150 = sphi 0, %s134
  $region4: #{attention_block_forward.3} parent=0 // loop_header_branch
    %13 = sbr.rel (%p11) target = $region8
  $region5: #{attention_block_forward.3} parent=0 // loop_body
    %s15 = ssub.s32 %s10, 1
    %s16 = ssub.s32 %s10, 2
    %s23 = sadd.s32 1, %s18
    %p24 = scmp.ge.s32.totalorder %s23, 1
    %s25 = scalar_select %p24, 0, %s23
    %s26 = sadd.s32 1, %s17
    %s27 = scalar_select %p24, %s26, %s17
    %p28 = scmp.ge.s32.totalorder %s27, 2
    %s29 = scalar_select %p28, 0, %s27
    %s30 = ssub.s32 %s17, %s29
    %s31 = ssub.s32 %s18, %s25
    %s32 = sor.u32 %s30, %s31
    %p33 = scmp.eq.s32.totalorder %s32, 0
    %s35 = sadd.s32 %s34, 1
    %s36 = scalar_select %p33, %s34, %s35
    %p39 = pneg %p33
    %p40 = scmp.eq.s32.totalorder %s10, 1
    %p41 = por %p39, %p40
    %p42 = scmp.ne.s32.totalorder %s34, %s37
    %p43 = scmp.eq.s32.totalorder %s10, 0
    %p44 = por %p42, %p43
    %p45 = scmp.ne.s32.totalorder %s34, %s37
    %p46 = scmp.eq.s32.totalorder %s15, 1
    %p47 = por %p45, %p46
    %p48 = scmp.ne.s32.totalorder %s37, %s38
    %p49 = scmp.eq.s32.totalorder %s15, 0
    %p50 = por %p48, %p49
    %p51 = scmp.ne.s32.totalorder %s37, %s38
    %p52 = scmp.eq.s32.totalorder %s16, 1
    %p53 = por %p51, %p52
    %p55 = scmp.ne.s32.totalorder %s38, %s54
    %p56 = scmp.eq.s32.totalorder %s16, 0
    %p57 = por %p55, %p56
    %s58 = ssub.s32 %s17, %s29
    %s59 = ssub.s32 %s18, %s25
    %s60 = sor.u32 %s58, %s59
    %p61 = scmp.eq.s32.totalorder %s60, 0
    %s63 = sadd.s32 %s62, 1
    %s64 = scalar_select %p61, %s62, %s63
    %p67 = pneg %p61
    %p68 = scmp.eq.s32.totalorder %s10, 1
    %p69 = por %p67, %p68
    %p70 = scmp.ne.s32.totalorder %s62, %s65
    %p71 = scmp.eq.s32.totalorder %s10, 0
    %p72 = por %p70, %p71
    %p73 = scmp.ne.s32.totalorder %s62, %s65
    %p74 = scmp.eq.s32.totalorder %s15, 1
    %p75 = por %p73, %p74
    %p76 = scmp.ne.s32.totalorder %s65, %s66
    %p77 = scmp.eq.s32.totalorder %s15, 0
    %p78 = por %p76, %p77
    %p79 = scmp.ne.s32.totalorder %s65, %s66
    %p80 = scmp.eq.s32.totalorder %s16, 1
    %p81 = por %p79, %p80
    %p83 = scmp.ne.s32.totalorder %s66, %s82
    %p84 = scmp.eq.s32.totalorder %s16, 0
    %p85 = por %p83, %p84
    %s87 = sadd.s32 %s86, 1
    %p90 = scmp.eq.s32.totalorder %s10, 1
    %p91 = scmp.ne.s32.totalorder %s86, %s88
    %p92 = scmp.eq.s32.totalorder %s10, 0
    %p93 = por %p91, %p92
    %p94 = scmp.ne.s32.totalorder %s86, %s88
    %p95 = scmp.eq.s32.totalorder %s15, 1
    %p96 = por %p94, %p95
    %p97 = scmp.ne.s32.totalorder %s88, %s89
    %p98 = scmp.eq.s32.totalorder %s15, 0
    %p99 = por %p97, %p98
    %p100 = scmp.ne.s32.totalorder %s88, %s89
    %p101 = scmp.eq.s32.totalorder %s16, 1
    %p102 = por %p100, %p101
    %p104 = scmp.ne.s32.totalorder %s89, %s103
    %p105 = scmp.eq.s32.totalorder %s16, 0
    %p106 = por %p104, %p105
    %s108 = sadd.s32 %s107, 1
    %p111 = scmp.eq.s32.totalorder %s10, 1
    %p112 = scmp.ne.s32.totalorder %s107, %s109
    %p113 = scmp.eq.s32.totalorder %s10, 0
    %p114 = por %p112, %p113
    %p115 = scmp.ne.s32.totalorder %s107, %s109
    %p116 = scmp.eq.s32.totalorder %s15, 1
    %p117 = por %p115, %p116
    %p118 = scmp.ne.s32.totalorder %s109, %s110
    %p119 = scmp.eq.s32.totalorder %s15, 0
    %p120 = por %p118, %p119
    %p121 = scmp.ne.s32.totalorder %s109, %s110
    %p122 = scmp.eq.s32.totalorder %s16, 1
    %p123 = por %p121, %p122
    %p125 = scmp.ne.s32.totalorder %s110, %s124
    %p126 = scmp.eq.s32.totalorder %s16, 0
    %p127 = por %p125, %p126
    %s128 = ssub.s32 %s17, %s29
    %p129 = scmp.eq.s32.totalorder %s128, 0
    %s131 = sadd.s32 %s130, 1
    %s132 = scalar_select %p129, %s130, %s131
    %p135 = pneg %p129
    %p136 = scmp.eq.s32.totalorder %s10, 1
    %p137 = por %p135, %p136
    %p138 = scmp.ne.s32.totalorder %s130, %s133
    %p139 = scmp.eq.s32.totalorder %s10, 0
    %p140 = por %p138, %p139
    %p141 = scmp.ne.s32.totalorder %s130, %s133
    %p142 = scmp.eq.s32.totalorder %s15, 1
    %p143 = por %p141, %p142
    %p144 = scmp.ne.s32.totalorder %s133, %s134
    %p145 = scmp.eq.s32.totalorder %s15, 0
    %p146 = por %p144, %p145
    %p147 = scmp.ne.s32.totalorder %s133, %s134
    %p148 = scmp.eq.s32.totalorder %s16, 1
    %p149 = por %p147, %p148
    %p151 = scmp.ne.s32.totalorder %s134, %s150
    %p152 = scmp.eq.s32.totalorder %s16, 0
    %p153 = por %p151, %p152
    %p154 = scmp.le.s32.totalorder 1, %s10
    %p155 = scmp.lt.s32.totalorder %s10, 3
    %p156 = pnand %p154, %p155
    %p157 = pneg %p156
    // Predicated region
    $region9: #{attention_block_forward.3} parent=5 // pred_check
      _
    $region10: #{attention_block_forward.3} parent=5 // pred_check_branch
      %159 = sbr.rel (%p156) target = $region12
    $region11: #{attention_block_forward.3} parent=5 // pred_region
      %s160 = ssub.s32 %s10, 1
      // Predicated region
      $region13: #{attention_block_forward.3} parent=11 // pred_check
        %p161 = pneg %p99
      $region14: #{attention_block_forward.3} parent=11 // pred_check_branch
        %163 = sbr.rel (%p161) target = $region16
      $region15: #{attention_block_forward.3} parent=11 // pred_region
        _
      $region16: #{attention_block_forward.3} parent=11 // pred_fallthru
        _
      // Predicated region
      $region17: #{attention_block_forward.3} parent=11 // pred_check
        %p164 = pneg %p120
      $region18: #{attention_block_forward.3} parent=11 // pred_check_branch
        %166 = sbr.rel (%p164) target = $region20
      $region19: #{attention_block_forward.3} parent=11 // pred_region
        _
      $region20: #{attention_block_forward.3} parent=11 // pred_fallthru
        _
    $region12: #{attention_block_forward.3} parent=5 // pred_fallthru
      _
    %p167 = scmp.lt.s32.totalorder %s10, 2
    // Predicated region
    $region21: #{attention_block_forward.3} parent=5 // pred_check
      %p168 = pneg %p167
    $region22: #{attention_block_forward.3} parent=5 // pred_check_branch
      %170 = sbr.rel (%p168) target = $region24
    $region23: #{attention_block_forward.3} parent=5 // pred_region
      // Predicated region
      $region25: #{attention_block_forward.3} parent=23 // pred_check
        %p171 = pneg %p44
      $region26: #{attention_block_forward.3} parent=23 // pred_check_branch
        %173 = sbr.rel (%p171) target = $region28
      $region27: #{attention_block_forward.3} parent=23 // pred_region
        %s174 = smul.u32 8, %s18
        %p175 = scmp.lt.s32.totalorder %s17, 1
        %s176 = scalar_select %p175, %s17, 1
        %p177 = scmp.lt.s32.totalorder %s174, 7
        %s178 = scalar_select %p177, %s174, 7
        %s179 = smul.addr %s176, 8
        %s180 = sadd.s32 %s178, %s179
        %s181 = smul.addr %s180, 4
        %s182 = scalar_lea.vmem %s0, %s181
        %s183 = smul.u32 8, %s18
      $region28: #{attention_block_forward.3} parent=23 // pred_fallthru
        _
      // Predicated region
      $region29: #{attention_block_forward.3} parent=23 // pred_check
        %p184 = pneg %p72
      $region30: #{attention_block_forward.3} parent=23 // pred_check_branch
        %186 = sbr.rel (%p184) target = $region32
      $region31: #{attention_block_forward.3} parent=23 // pred_region
        %s187 = smul.u32 8, %s18
        %p188 = scmp.lt.s32.totalorder %s17, 1
        %s189 = scalar_select %p188, %s17, 1
        %p190 = scmp.lt.s32.totalorder %s187, 7
        %s191 = scalar_select %p190, %s187, 7
        %s192 = smul.addr %s189, 8
        %s193 = sadd.s32 %s191, %s192
        %s194 = smul.addr %s193, 4
        %s195 = scalar_lea.vmem %s1, %s194
        %s196 = smul.u32 8, %s18
      $region32: #{attention_block_forward.3} parent=23 // pred_fallthru
        _
    $region24: #{attention_block_forward.3} parent=5 // pred_fallthru
      _
    %p197 = scmp.le.s32.totalorder 1, %s10
    %p198 = scmp.lt.s32.totalorder %s10, 3
    %p199 = pnand %p197, %p198
    %p200 = pneg %p199
    // Predicated region
    $region33: #{attention_block_forward.3} parent=5 // pred_check
      _
    $region34: #{attention_block_forward.3} parent=5 // pred_check_branch
      %202 = sbr.rel (%p199) target = $region36
    $region35: #{attention_block_forward.3} parent=5 // pred_region
      %s203 = ssub.s32 %s10, 1
      %s204 = smul.u32 8, %s20
      %p205 = scmp.lt.s32.totalorder %s19, 1
      %s206 = scalar_select %p205, %s19, 1
      %p207 = scmp.lt.s32.totalorder %s204, 7
      %s208 = scalar_select %p207, %s204, 7
      %s209 = smul.addr %s206, 8
      %s210 = sadd.s32 %s208, %s209
      %s211 = smul.addr %s210, 4
      %s212 = scalar_lea.vmem %s0, %s211
      %p213 = pneg %p50
      %p214 = pneg %p47
      %s215 = smul.u32 8, %s20
      %p216 = scmp.lt.s32.totalorder %s19, 1
      %s217 = scalar_select %p216, %s19, 1
      %p218 = scmp.lt.s32.totalorder %s215, 7
      %s219 = scalar_select %p218, %s215, 7
      %s220 = smul.addr %s217, 8
      %s221 = sadd.s32 %s219, %s220
      %s222 = smul.addr %s221, 4
      %s223 = scalar_lea.vmem %s1, %s222
      %p224 = pneg %p78
      %p225 = pneg %p75
      %p226 = pneg %p99
      %p227 = pneg %p96
      %p228 = pneg %p120
      %p229 = pneg %p117
      %p230 = pneg %p146
      %p231 = pneg %p143
      %p232 = scmp.lt.s32.totalorder %s19, 1
      %s233 = scalar_select %p232, %s19, 1
      %s234 = smul.addr %s233, 8
      %s235 = scalar_lea.vmem %s4, %s234
      %s236 = smul.u32 8, %s20
      %p237 = scmp.lt.s32.totalorder %s19, 1
      %s238 = scalar_select %p237, %s19, 1
      %p239 = scmp.lt.s32.totalorder %s236, 7
      %s240 = scalar_select %p239, %s236, 7
      %s241 = smul.addr %s238, 8
      %s242 = sadd.s32 %s240, %s241
      %s243 = smul.addr %s242, 4
      %s244 = scalar_lea.vmem %s0, %s243
      %s245 = smul.u32 8, %s20
      %s246 = smul.u32 8, %s20
      %p247 = scmp.lt.s32.totalorder %s19, 1
      %s248 = scalar_select %p247, %s19, 1
      %p249 = scmp.lt.s32.totalorder %s246, 7
      %s250 = scalar_select %p249, %s246, 7
      %s251 = smul.addr %s248, 8
      %s252 = sadd.s32 %s250, %s251
      %s253 = smul.addr %s252, 4
      %s254 = scalar_lea.vmem %s1, %s253
      %s255 = smul.u32 8, %s20
      %p256 = scmp.lt.s32.totalorder %s19, 1
      %s257 = scalar_select %p256, %s19, 1
      %s258 = smul.addr %s257, 8
      %s259 = scalar_lea.vmem %s4, %s258
      %p260 = scmp.eq.s32.totalorder %s20, 0
      // Predicated region
      $region37: #{attention_block_forward.3} parent=35 // pred_check
        %p261 = pneg %p260
      $region38: #{attention_block_forward.3} parent=35 // pred_check_branch
        %263 = sbr.rel (%p261) target = $region40
      $region39: #{attention_block_forward.3} parent=35 // pred_region
        %vm264 = vcmask 31744
        %265 = vst.msk [vmem:[%s259] sm:$0xff] %vm264, 0.0
      $region40: #{attention_block_forward.3} parent=35 // pred_fallthru
        _
      %v266 = vld [vmem:[%s2] sm:$0xff]
      %v267 = vld [vmem:[%s244] sm:$0xff]
      %v268 = vld [vmem:[%s244 + $0x8] sm:$0xff]
      %v269 = vld [vmem:[%s244 + $0x10] sm:$0xff]
      %v270 = vld [vmem:[%s244 + $0x18] sm:$0xff]
      %v275 = vcombine.high %v267, %v267
      %v276 = vcombine.high %v268, %v268
      %v277 = vcombine.high %v269, %v269
      %v278 = vcombine.high %v270, %v270
      %vm279 = vcmask 31744
      %v281 = vsel %vm279, %v266, 0
      %vm283 = vcmask 1043456
      %v284 = vsel %vm283, %v267, 0
      %v286 = vsel %vm283, %v275, 0
      %v288 = vsel %vm283, %v268, 0
      %v290 = vsel %vm283, %v276, 0
      %v292 = vsel %vm283, %v269, 0
      %v294 = vsel %vm283, %v277, 0
      %v296 = vsel %vm283, %v270, 0
      %v298 = vsel %vm283, %v278, 0
      %300 = vmatprep.subr.mxu0 %v286
      %301 = vmatpush1.msra.mxu0 %v284
      %302 = vmatprep.subr.mxu0 0.0
      %303 = vmatpush1.msra.mxu0 0.0
      %304 = vmatprep.subr.mxu0 0.0
      %305 = vmatpush1.msra.mxu0 0.0
      %306 = vmatprep.subr.mxu0 0.0
      %307 = vmatpush1.msra.mxu0 0.0
      %308 = vmatprep.subr.mxu0 0.0
      %309 = vmatpush1.msra.mxu0 0.0
      %310 = vmatprep.subr.mxu0 0.0
      %311 = vmatpush1.msra.mxu0 0.0
      %312 = vmatprep.subr.mxu0 0.0
      %313 = vmatpush1.msra.mxu0 0.0
      %314 = vmatprep.subr.mxu0 0.0
      %315 = vmatpush1.msra.mxu0 0.0
      %316 = vmatprep.subr.mxu0 0.0
      %317 = vmatpush1.msra.mxu0 0.0
      %318 = vmatprep.subr.mxu0 0.0
      %319 = vmatpush1.msra.mxu0 0.0
      %320 = vmatprep.subr.mxu0 0.0
      %321 = vmatpush1.msra.mxu0 0.0
      %322 = vmatprep.subr.mxu0 0.0
      %323 = vmatpush1.msra.mxu0 0.0
      %324 = vmatprep.subr.mxu0 0.0
      %325 = vmatpush1.msra.mxu0 0.0
      %326 = vmatprep.subr.mxu0 0.0
      %327 = vmatpush1.msra.mxu0 0.0
      %328 = vmatprep.subr.mxu0 0.0
      %329 = vmatpush1.msra.mxu0 0.0
      %330 = vmatprep.subr.mxu0 0.0
      %331 = vmatpush1.msra.mxu0 0.0
      %332 = vmatprep.subr.mxu0 0.0
      %333 = vmatpush1.msra.mxu0 0.0
      %334 = vmatprep.subr.mxu0 0.0
      %335 = vmatpush1.msra.mxu0 0.0
      %336 = vmatprep.subr.mxu0 0.0
      %337 = vmatpush1.msra.mxu0 0.0
      %338 = vmatprep.subr.mxu0 0.0
      %339 = vmatpush1.msra.mxu0 0.0
      %340 = vmatprep.subr.mxu0 0.0
      %341 = vmatpush1.msra.mxu0 0.0
      %342 = vmatprep.subr.mxu0 0.0
      %343 = vmatpush1.msra.mxu0 0.0
      %344 = vmatprep.subr.mxu0 0.0
      %345 = vmatpush1.msra.mxu0 0.0
      %346 = vmatprep.subr.mxu0 0.0
      %347 = vmatpush1.msra.mxu0 0.0
      %348 = vmatprep.subr.mxu0 0.0
      %349 = vmatpush1.msra.mxu0 0.0
      %350 = vmatprep.subr.mxu0 0.0
      %351 = vmatpush1.msra.mxu0 0.0
      %352 = vmatprep.subr.mxu0 0.0
      %353 = vmatpush1.msra.mxu0 0.0
      %354 = vmatprep.subr.mxu0 0.0
      %355 = vmatpush1.msra.mxu0 0.0
      %356 = vmatprep.subr.mxu0 0.0
      %357 = vmatpush1.msra.mxu0 0.0
      %358 = vmatprep.subr.mxu0 0.0
      %359 = vmatpush1.msra.mxu0 0.0
      %360 = vmatprep.subr.mxu0 0.0
      %361 = vmatpush1.msra.mxu0 0.0
      %362 = vmatprep.subr.mxu0 0.0
      %363 = vmatpush1.msra.mxu0 0.0
      %364 = vmatprep.mubr.f32.mxu0 0.0
      %365 = vmatmul.mubr.f32.gmra.mrb[0].mxu0 %v281
      %v366 = vpop.f32.mrb[0].mxu0
      %v367 = vadd.f32 0.0, %v366
      %v368 = vpop.f32.mrb[0].mxu0
      %v369 = vadd.f32 0.0, %v368
      %370 = vdwg.mxu0
      %371 = vmatprep.subr.mxu0 %v290
      %372 = vmatpush1.msra.mxu0 %v288
      %373 = vmatprep.subr.mxu0 0.0
      %374 = vmatpush1.msra.mxu0 0.0
      %375 = vmatprep.subr.mxu0 0.0
      %376 = vmatpush1.msra.mxu0 0.0
      %377 = vmatprep.subr.mxu0 0.0
      %378 = vmatpush1.msra.mxu0 0.0
      %379 = vmatprep.subr.mxu0 0.0
      %380 = vmatpush1.msra.mxu0 0.0
      %381 = vmatprep.subr.mxu0 0.0
      %382 = vmatpush1.msra.mxu0 0.0
      %383 = vmatprep.subr.mxu0 0.0
      %384 = vmatpush1.msra.mxu0 0.0
      %385 = vmatprep.subr.mxu0 0.0
      %386 = vmatpush1.msra.mxu0 0.0
      %387 = vmatprep.subr.mxu0 0.0
      %388 = vmatpush1.msra.mxu0 0.0
      %389 = vmatprep.subr.mxu0 0.0
      %390 = vmatpush1.msra.mxu0 0.0
      %391 = vmatprep.subr.mxu0 0.0
      %392 = vmatpush1.msra.mxu0 0.0
      %393 = vmatprep.subr.mxu0 0.0
      %394 = vmatpush1.msra.mxu0 0.0
      %395 = vmatprep.subr.mxu0 0.0
      %396 = vmatpush1.msra.mxu0 0.0
      %397 = vmatprep.subr.mxu0 0.0
      %398 = vmatpush1.msra.mxu0 0.0
      %399 = vmatprep.subr.mxu0 0.0
      %400 = vmatpush1.msra.mxu0 0.0
      %401 = vmatprep.subr.mxu0 0.0
      %402 = vmatpush1.msra.mxu0 0.0
      %403 = vmatprep.subr.mxu0 0.0
      %404 = vmatpush1.msra.mxu0 0.0
      %405 = vmatprep.subr.mxu0 0.0
      %406 = vmatpush1.msra.mxu0 0.0
      %407 = vmatprep.subr.mxu0 0.0
      %408 = vmatpush1.msra.mxu0 0.0
      %409 = vmatprep.subr.mxu0 0.0
      %410 = vmatpush1.msra.mxu0 0.0
      %411 = vmatprep.subr.mxu0 0.0
      %412 = vmatpush1.msra.mxu0 0.0
      %413 = vmatprep.subr.mxu0 0.0
      %414 = vmatpush1.msra.mxu0 0.0
      %415 = vmatprep.subr.mxu0 0.0
      %416 = vmatpush1.msra.mxu0 0.0
      %417 = vmatprep.subr.mxu0 0.0
      %418 = vmatpush1.msra.mxu0 0.0
      %419 = vmatprep.subr.mxu0 0.0
      %420 = vmatpush1.msra.mxu0 0.0
      %421 = vmatprep.subr.mxu0 0.0
      %422 = vmatpush1.msra.mxu0 0.0
      %423 = vmatprep.subr.mxu0 0.0
      %424 = vmatpush1.msra.mxu0 0.0
      %425 = vmatprep.subr.mxu0 0.0
      %426 = vmatpush1.msra.mxu0 0.0
      %427 = vmatprep.subr.mxu0 0.0
      %428 = vmatpush1.msra.mxu0 0.0
      %429 = vmatprep.subr.mxu0 0.0
      %430 = vmatpush1.msra.mxu0 0.0
      %431 = vmatprep.subr.mxu0 0.0
      %432 = vmatpush1.msra.mxu0 0.0
      %433 = vmatprep.subr.mxu0 0.0
      %434 = vmatpush1.msra.mxu0 0.0
      %435 = vmatprep.mubr.f32.mxu0 0.0
      %436 = vmatmul.mubr.f32.gmra.mrb[0].mxu0 %v281
      %v437 = vpop.f32.mrb[0].mxu0
      %v438 = vadd.f32 0.0, %v437
      %v439 = vpop.f32.mrb[0].mxu0
      %v440 = vadd.f32 0.0, %v439
      %441 = vdwg.mxu0
      %442 = vmatprep.subr.mxu0 %v294
      %443 = vmatpush1.msra.mxu0 %v292
      %444 = vmatprep.subr.mxu0 0.0
      %445 = vmatpush1.msra.mxu0 0.0
      %446 = vmatprep.subr.mxu0 0.0
      %447 = vmatpush1.msra.mxu0 0.0
      %448 = vmatprep.subr.mxu0 0.0
      %449 = vmatpush1.msra.mxu0 0.0
      %450 = vmatprep.subr.mxu0 0.0
      %451 = vmatpush1.msra.mxu0 0.0
      %452 = vmatprep.subr.mxu0 0.0
      %453 = vmatpush1.msra.mxu0 0.0
      %454 = vmatprep.subr.mxu0 0.0
      %455 = vmatpush1.msra.mxu0 0.0
      %456 = vmatprep.subr.mxu0 0.0
      %457 = vmatpush1.msra.mxu0 0.0
      %458 = vmatprep.subr.mxu0 0.0
      %459 = vmatpush1.msra.mxu0 0.0
      %460 = vmatprep.subr.mxu0 0.0
      %461 = vmatpush1.msra.mxu0 0.0
      %462 = vmatprep.subr.mxu0 0.0
      %463 = vmatpush1.msra.mxu0 0.0
      %464 = vmatprep.subr.mxu0 0.0
      %465 = vmatpush1.msra.mxu0 0.0
      %466 = vmatprep.subr.mxu0 0.0
      %467 = vmatpush1.msra.mxu0 0.0
      %468 = vmatprep.subr.mxu0 0.0
      %469 = vmatpush1.msra.mxu0 0.0
      %470 = vmatprep.subr.mxu0 0.0
      %471 = vmatpush1.msra.mxu0 0.0
      %472 = vmatprep.subr.mxu0 0.0
      %473 = vmatpush1.msra.mxu0 0.0
      %474 = vmatprep.subr.mxu0 0.0
      %475 = vmatpush1.msra.mxu0 0.0
      %476 = vmatprep.subr.mxu0 0.0
      %477 = vmatpush1.msra.mxu0 0.0
      %478 = vmatprep.subr.mxu0 0.0
      %479 = vmatpush1.msra.mxu0 0.0
      %480 = vmatprep.subr.mxu0 0.0
      %481 = vmatpush1.msra.mxu0 0.0
      %482 = vmatprep.subr.mxu0 0.0
      %483 = vmatpush1.msra.mxu0 0.0
      %484 = vmatprep.subr.mxu0 0.0
      %485 = vmatpush1.msra.mxu0 0.0
      %486 = vmatprep.subr.mxu0 0.0
      %487 = vmatpush1.msra.mxu0 0.0
      %488 = vmatprep.subr.mxu0 0.0
      %489 = vmatpush1.msra.mxu0 0.0
      %490 = vmatprep.subr.mxu0 0.0
      %491 = vmatpush1.msra.mxu0 0.0
      %492 = vmatprep.subr.mxu0 0.0
      %493 = vmatpush1.msra.mxu0 0.0
      %494 = vmatprep.subr.mxu0 0.0
      %495 = vmatpush1.msra.mxu0 0.0
      %496 = vmatprep.subr.mxu0 0.0
      %497 = vmatpush1.msra.mxu0 0.0
      %498 = vmatprep.subr.mxu0 0.0
      %499 = vmatpush1.msra.mxu0 0.0
      %500 = vmatprep.subr.mxu0 0.0
      %501 = vmatpush1.msra.mxu0 0.0
      %502 = vmatprep.subr.mxu0 0.0
      %503 = vmatpush1.msra.mxu0 0.0
      %504 = vmatprep.subr.mxu0 0.0
      %505 = vmatpush1.msra.mxu0 0.0
      %506 = vmatprep.mubr.f32.mxu0 0.0
      %507 = vmatmul.mubr.f32.gmra.mrb[0].mxu0 %v281
      %v508 = vpop.f32.mrb[0].mxu0
      %v509 = vadd.f32 0.0, %v508
      %v510 = vpop.f32.mrb[0].mxu0
      %v511 = vadd.f32 0.0, %v510
      %512 = vdwg.mxu0
      %513 = vmatprep.subr.mxu0 %v298
      %514 = vmatpush1.msra.mxu0 %v296
      %515 = vmatprep.subr.mxu0 0.0
      %516 = vmatpush1.msra.mxu0 0.0
      %517 = vmatprep.subr.mxu0 0.0
      %518 = vmatpush1.msra.mxu0 0.0
      %519 = vmatprep.subr.mxu0 0.0
      %520 = vmatpush1.msra.mxu0 0.0
      %521 = vmatprep.subr.mxu0 0.0
      %522 = vmatpush1.msra.mxu0 0.0
      %523 = vmatprep.subr.mxu0 0.0
      %524 = vmatpush1.msra.mxu0 0.0
      %525 = vmatprep.subr.mxu0 0.0
      %526 = vmatpush1.msra.mxu0 0.0
      %527 = vmatprep.subr.mxu0 0.0
      %528 = vmatpush1.msra.mxu0 0.0
      %529 = vmatprep.subr.mxu0 0.0
      %530 = vmatpush1.msra.mxu0 0.0
      %531 = vmatprep.subr.mxu0 0.0
      %532 = vmatpush1.msra.mxu0 0.0
      %533 = vmatprep.subr.mxu0 0.0
      %534 = vmatpush1.msra.mxu0 0.0
      %535 = vmatprep.subr.mxu0 0.0
      %536 = vmatpush1.msra.mxu0 0.0
      %537 = vmatprep.subr.mxu0 0.0
      %538 = vmatpush1.msra.mxu0 0.0
      %539 = vmatprep.subr.mxu0 0.0
      %540 = vmatpush1.msra.mxu0 0.0
      %541 = vmatprep.subr.mxu0 0.0
      %542 = vmatpush1.msra.mxu0 0.0
      %543 = vmatprep.subr.mxu0 0.0
      %544 = vmatpush1.msra.mxu0 0.0
      %545 = vmatprep.subr.mxu0 0.0
      %546 = vmatpush1.msra.mxu0 0.0
      %547 = vmatprep.subr.mxu0 0.0
      %548 = vmatpush1.msra.mxu0 0.0
      %549 = vmatprep.subr.mxu0 0.0
      %550 = vmatpush1.msra.mxu0 0.0
      %551 = vmatprep.subr.mxu0 0.0
      %552 = vmatpush1.msra.mxu0 0.0
      %553 = vmatprep.subr.mxu0 0.0
      %554 = vmatpush1.msra.mxu0 0.0
      %555 = vmatprep.subr.mxu0 0.0
      %556 = vmatpush1.msra.mxu0 0.0
      %557 = vmatprep.subr.mxu0 0.0
      %558 = vmatpush1.msra.mxu0 0.0
      %559 = vmatprep.subr.mxu0 0.0
      %560 = vmatpush1.msra.mxu0 0.0
      %561 = vmatprep.subr.mxu0 0.0
      %562 = vmatpush1.msra.mxu0 0.0
      %563 = vmatprep.subr.mxu0 0.0
      %564 = vmatpush1.msra.mxu0 0.0
      %565 = vmatprep.subr.mxu0 0.0
      %566 = vmatpush1.msra.mxu0 0.0
      %567 = vmatprep.subr.mxu0 0.0
      %568 = vmatpush1.msra.mxu0 0.0
      %569 = vmatprep.subr.mxu0 0.0
      %570 = vmatpush1.msra.mxu0 0.0
      %571 = vmatprep.subr.mxu0 0.0
      %572 = vmatpush1.msra.mxu0 0.0
      %573 = vmatprep.subr.mxu0 0.0
      %574 = vmatpush1.msra.mxu0 0.0
      %575 = vmatprep.subr.mxu0 0.0
      %576 = vmatpush1.msra.mxu0 0.0
      %577 = vmatprep.mubr.f32.mxu0 0.0
      %578 = vmatmul.mubr.f32.gmra.mrb[0].mxu0 %v281
      %v579 = vpop.f32.mrb[0].mxu0
      %v580 = vadd.f32 0.0, %v579
      %v581 = vpop.f32.mrb[0].mxu0
      %v582 = vadd.f32 0.0, %v581
      %583 = vdwg.mxu0
      %v584 = vld [vmem:[%s3] sm:$0xff]
      %v585 = vld [vmem:[%s254] sm:$0xff]
      %v586 = vld [vmem:[%s254 + $0x8] sm:$0xff]
      %v587 = vld [vmem:[%s254 + $0x10] sm:$0xff]
      %v588 = vld [vmem:[%s254 + $0x18] sm:$0xff]
      %v593 = vcombine.high %v585, %v585
      %v594 = vcombine.high %v586, %v586
      %v595 = vcombine.high %v587, %v587
      %v596 = vcombine.high %v588, %v588
      %v598 = vsel %vm279, %v584, 0
      %v600 = vsel %vm283, %v585, 0
      %v602 = vsel %vm283, %v593, 0
      %v604 = vsel %vm283, %v586, 0
      %v606 = vsel %vm283, %v594, 0
      %v608 = vsel %vm283, %v587, 0
      %v610 = vsel %vm283, %v595, 0
      %v612 = vsel %vm283, %v588, 0
      %v614 = vsel %vm283, %v596, 0
      %616 = vmatprep.subr.mxu0 %v602
      %617 = vmatpush1.msra.mxu0 %v600
      %618 = vmatprep.subr.mxu0 0.0
      %619 = vmatpush1.msra.mxu0 0.0
      %620 = vmatprep.subr.mxu0 0.0
      %621 = vmatpush1.msra.mxu0 0.0
      %622 = vmatprep.subr.mxu0 0.0
      %623 = vmatpush1.msra.mxu0 0.0
      %624 = vmatprep.subr.mxu0 0.0
      %625 = vmatpush1.msra.mxu0 0.0
      %626 = vmatprep.subr.mxu0 0.0
      %627 = vmatpush1.msra.mxu0 0.0
      %628 = vmatprep.subr.mxu0 0.0
      %629 = vmatpush1.msra.mxu0 0.0
      %630 = vmatprep.subr.mxu0 0.0
      %631 = vmatpush1.msra.mxu0 0.0
      %632 = vmatprep.subr.mxu0 0.0
      %633 = vmatpush1.msra.mxu0 0.0
      %634 = vmatprep.subr.mxu0 0.0
      %635 = vmatpush1.msra.mxu0 0.0
      %636 = vmatprep.subr.mxu0 0.0
      %637 = vmatpush1.msra.mxu0 0.0
      %638 = vmatprep.subr.mxu0 0.0
      %639 = vmatpush1.msra.mxu0 0.0
      %640 = vmatprep.subr.mxu0 0.0
      %641 = vmatpush1.msra.mxu0 0.0
      %642 = vmatprep.subr.mxu0 0.0
      %643 = vmatpush1.msra.mxu0 0.0
      %644 = vmatprep.subr.mxu0 0.0
      %645 = vmatpush1.msra.mxu0 0.0
      %646 = vmatprep.subr.mxu0 0.0
      %647 = vmatpush1.msra.mxu0 0.0
      %648 = vmatprep.subr.mxu0 0.0
      %649 = vmatpush1.msra.mxu0 0.0
      %650 = vmatprep.subr.mxu0 0.0
      %651 = vmatpush1.msra.mxu0 0.0
      %652 = vmatprep.subr.mxu0 0.0
      %653 = vmatpush1.msra.mxu0 0.0
      %654 = vmatprep.subr.mxu0 0.0
      %655 = vmatpush1.msra.mxu0 0.0
      %656 = vmatprep.subr.mxu0 0.0
      %657 = vmatpush1.msra.mxu0 0.0
      %658 = vmatprep.subr.mxu0 0.0
      %659 = vmatpush1.msra.mxu0 0.0
      %660 = vmatprep.subr.mxu0 0.0
      %661 = vmatpush1.msra.mxu0 0.0
      %662 = vmatprep.subr.mxu0 0.0
      %663 = vmatpush1.msra.mxu0 0.0
      %664 = vmatprep.subr.mxu0 0.0
      %665 = vmatpush1.msra.mxu0 0.0
      %666 = vmatprep.subr.mxu0 0.0
      %667 = vmatpush1.msra.mxu0 0.0
      %668 = vmatprep.subr.mxu0 0.0
      %669 = vmatpush1.msra.mxu0 0.0
      %670 = vmatprep.subr.mxu0 0.0
      %671 = vmatpush1.msra.mxu0 0.0
      %672 = vmatprep.subr.mxu0 0.0
      %673 = vmatpush1.msra.mxu0 0.0
      %674 = vmatprep.subr.mxu0 0.0
      %675 = vmatpush1.msra.mxu0 0.0
      %676 = vmatprep.subr.mxu0 0.0
      %677 = vmatpush1.msra.mxu0 0.0
      %678 = vmatprep.subr.mxu0 0.0
      %679 = vmatpush1.msra.mxu0 0.0
      %680 = vmatprep.mubr.f32.mxu0 0.0
      %681 = vmatmul.mubr.f32.gmra.mrb[0].mxu0 %v598
      %v682 = vpop.f32.mrb[0].mxu0
      %v683 = vadd.f32 0.0, %v682
      %v684 = vpop.f32.mrb[0].mxu0
      %v685 = vadd.f32 0.0, %v684
      %686 = vdwg.mxu0
      %687 = vmatprep.subr.mxu0 %v606
      %688 = vmatpush1.msra.mxu0 %v604
      %689 = vmatprep.subr.mxu0 0.0
      %690 = vmatpush1.msra.mxu0 0.0
      %691 = vmatprep.subr.mxu0 0.0
      %692 = vmatpush1.msra.mxu0 0.0
      %693 = vmatprep.subr.mxu0 0.0
      %694 = vmatpush1.msra.mxu0 0.0
      %695 = vmatprep.subr.mxu0 0.0
      %696 = vmatpush1.msra.mxu0 0.0
      %697 = vmatprep.subr.mxu0 0.0
      %698 = vmatpush1.msra.mxu0 0.0
      %699 = vmatprep.subr.mxu0 0.0
      %700 = vmatpush1.msra.mxu0 0.0
      %701 = vmatprep.subr.mxu0 0.0
      %702 = vmatpush1.msra.mxu0 0.0
      %703 = vmatprep.subr.mxu0 0.0
      %704 = vmatpush1.msra.mxu0 0.0
      %705 = vmatprep.subr.mxu0 0.0
      %706 = vmatpush1.msra.mxu0 0.0
      %707 = vmatprep.subr.mxu0 0.0
      %708 = vmatpush1.msra.mxu0 0.0
      %709 = vmatprep.subr.mxu0 0.0
      %710 = vmatpush1.msra.mxu0 0.0
      %711 = vmatprep.subr.mxu0 0.0
      %712 = vmatpush1.msra.mxu0 0.0
      %713 = vmatprep.subr.mxu0 0.0
      %714 = vmatpush1.msra.mxu0 0.0
      %715 = vmatprep.subr.mxu0 0.0
      %716 = vmatpush1.msra.mxu0 0.0
      %717 = vmatprep.subr.mxu0 0.0
      %718 = vmatpush1.msra.mxu0 0.0
      %719 = vmatprep.subr.mxu0 0.0
      %720 = vmatpush1.msra.mxu0 0.0
      %721 = vmatprep.subr.mxu0 0.0
      %722 = vmatpush1.msra.mxu0 0.0
      %723 = vmatprep.subr.mxu0 0.0
      %724 = vmatpush1.msra.mxu0 0.0
      %725 = vmatprep.subr.mxu0 0.0
      %726 = vmatpush1.msra.mxu0 0.0
      %727 = vmatprep.subr.mxu0 0.0
      %728 = vmatpush1.msra.mxu0 0.0
      %729 = vmatprep.subr.mxu0 0.0
      %730 = vmatpush1.msra.mxu0 0.0
      %731 = vmatprep.subr.mxu0 0.0
      %732 = vmatpush1.msra.mxu0 0.0
      %733 = vmatprep.subr.mxu0 0.0
      %734 = vmatpush1.msra.mxu0 0.0
      %735 = vmatprep.subr.mxu0 0.0
      %736 = vmatpush1.msra.mxu0 0.0
      %737 = vmatprep.subr.mxu0 0.0
      %738 = vmatpush1.msra.mxu0 0.0
      %739 = vmatprep.subr.mxu0 0.0
      %740 = vmatpush1.msra.mxu0 0.0
      %741 = vmatprep.subr.mxu0 0.0
      %742 = vmatpush1.msra.mxu0 0.0
      %743 = vmatprep.subr.mxu0 0.0
      %744 = vmatpush1.msra.mxu0 0.0
      %745 = vmatprep.subr.mxu0 0.0
      %746 = vmatpush1.msra.mxu0 0.0
      %747 = vmatprep.subr.mxu0 0.0
      %748 = vmatpush1.msra.mxu0 0.0
      %749 = vmatprep.subr.mxu0 0.0
      %750 = vmatpush1.msra.mxu0 0.0
      %751 = vmatprep.mubr.f32.mxu0 0.0
      %752 = vmatmul.mubr.f32.gmra.mrb[0].mxu0 %v598
      %v753 = vpop.f32.mrb[0].mxu0
      %v754 = vadd.f32 0.0, %v753
      %v755 = vpop.f32.mrb[0].mxu0
      %v756 = vadd.f32 0.0, %v755
      %757 = vdwg.mxu0
      %758 = vmatprep.subr.mxu0 %v610
      %759 = vmatpush1.msra.mxu0 %v608
      %760 = vmatprep.subr.mxu0 0.0
      %761 = vmatpush1.msra.mxu0 0.0
      %762 = vmatprep.subr.mxu0 0.0
      %763 = vmatpush1.msra.mxu0 0.0
      %764 = vmatprep.subr.mxu0 0.0
      %765 = vmatpush1.msra.mxu0 0.0
      %766 = vmatprep.subr.mxu0 0.0
      %767 = vmatpush1.msra.mxu0 0.0
      %768 = vmatprep.subr.mxu0 0.0
      %769 = vmatpush1.msra.mxu0 0.0
      %770 = vmatprep.subr.mxu0 0.0
      %771 = vmatpush1.msra.mxu0 0.0
      %772 = vmatprep.subr.mxu0 0.0
      %773 = vmatpush1.msra.mxu0 0.0
      %774 = vmatprep.subr.mxu0 0.0
      %775 = vmatpush1.msra.mxu0 0.0
      %776 = vmatprep.subr.mxu0 0.0
      %777 = vmatpush1.msra.mxu0 0.0
      %778 = vmatprep.subr.mxu0 0.0
      %779 = vmatpush1.msra.mxu0 0.0
      %780 = vmatprep.subr.mxu0 0.0
      %781 = vmatpush1.msra.mxu0 0.0
      %782 = vmatprep.subr.mxu0 0.0
      %783 = vmatpush1.msra.mxu0 0.0
      %784 = vmatprep.subr.mxu0 0.0
      %785 = vmatpush1.msra.mxu0 0.0
      %786 = vmatprep.subr.mxu0 0.0
      %787 = vmatpush1.msra.mxu0 0.0
      %788 = vmatprep.subr.mxu0 0.0
      %789 = vmatpush1.msra.mxu0 0.0
      %790 = vmatprep.subr.mxu0 0.0
      %791 = vmatpush1.msra.mxu0 0.0
      %792 = vmatprep.subr.mxu0 0.0
      %793 = vmatpush1.msra.mxu0 0.0
      %794 = vmatprep.subr.mxu0 0.0
      %795 = vmatpush1.msra.mxu0 0.0
      %796 = vmatprep.subr.mxu0 0.0
      %797 = vmatpush1.msra.mxu0 0.0
      %798 = vmatprep.subr.mxu0 0.0
      %799 = vmatpush1.msra.mxu0 0.0
      %800 = vmatprep.subr.mxu0 0.0
      %801 = vmatpush1.msra.mxu0 0.0
      %802 = vmatprep.subr.mxu0 0.0
      %803 = vmatpush1.msra.mxu0 0.0
      %804 = vmatprep.subr.mxu0 0.0
      %805 = vmatpush1.msra.mxu0 0.0
      %806 = vmatprep.subr.mxu0 0.0
      %807 = vmatpush1.msra.mxu0 0.0
      %808 = vmatprep.subr.mxu0 0.0
      %809 = vmatpush1.msra.mxu0 0.0
      %810 = vmatprep.subr.mxu0 0.0
      %811 = vmatpush1.msra.mxu0 0.0
      %812 = vmatprep.subr.mxu0 0.0
      %813 = vmatpush1.msra.mxu0 0.0
      %814 = vmatprep.subr.mxu0 0.0
      %815 = vmatpush1.msra.mxu0 0.0
      %816 = vmatprep.subr.mxu0 0.0
      %817 = vmatpush1.msra.mxu0 0.0
      %818 = vmatprep.subr.mxu0 0.0
      %819 = vmatpush1.msra.mxu0 0.0
      %820 = vmatprep.subr.mxu0 0.0
      %821 = vmatpush1.msra.mxu0 0.0
      %822 = vmatprep.mubr.f32.mxu0 0.0
      %823 = vmatmul.mubr.f32.gmra.mrb[0].mxu0 %v598
      %v824 = vpop.f32.mrb[0].mxu0
      %v825 = vadd.f32 0.0, %v824
      %v826 = vpop.f32.mrb[0].mxu0
      %v827 = vadd.f32 0.0, %v826
      %828 = vdwg.mxu0
      %829 = vmatprep.subr.mxu0 %v614
      %830 = vmatpush1.msra.mxu0 %v612
      %831 = vmatprep.subr.mxu0 0.0
      %832 = vmatpush1.msra.mxu0 0.0
      %833 = vmatprep.subr.mxu0 0.0
      %834 = vmatpush1.msra.mxu0 0.0
      %835 = vmatprep.subr.mxu0 0.0
      %836 = vmatpush1.msra.mxu0 0.0
      %837 = vmatprep.subr.mxu0 0.0
      %838 = vmatpush1.msra.mxu0 0.0
      %839 = vmatprep.subr.mxu0 0.0
      %840 = vmatpush1.msra.mxu0 0.0
      %841 = vmatprep.subr.mxu0 0.0
      %842 = vmatpush1.msra.mxu0 0.0
      %843 = vmatprep.subr.mxu0 0.0
      %844 = vmatpush1.msra.mxu0 0.0
      %845 = vmatprep.subr.mxu0 0.0
      %846 = vmatpush1.msra.mxu0 0.0
      %847 = vmatprep.subr.mxu0 0.0
      %848 = vmatpush1.msra.mxu0 0.0
      %849 = vmatprep.subr.mxu0 0.0
      %850 = vmatpush1.msra.mxu0 0.0
      %851 = vmatprep.subr.mxu0 0.0
      %852 = vmatpush1.msra.mxu0 0.0
      %853 = vmatprep.subr.mxu0 0.0
      %854 = vmatpush1.msra.mxu0 0.0
      %855 = vmatprep.subr.mxu0 0.0
      %856 = vmatpush1.msra.mxu0 0.0
      %857 = vmatprep.subr.mxu0 0.0
      %858 = vmatpush1.msra.mxu0 0.0
      %859 = vmatprep.subr.mxu0 0.0
      %860 = vmatpush1.msra.mxu0 0.0
      %861 = vmatprep.subr.mxu0 0.0
      %862 = vmatpush1.msra.mxu0 0.0
      %863 = vmatprep.subr.mxu0 0.0
      %864 = vmatpush1.msra.mxu0 0.0
      %865 = vmatprep.subr.mxu0 0.0
      %866 = vmatpush1.msra.mxu0 0.0
      %867 = vmatprep.subr.mxu0 0.0
      %868 = vmatpush1.msra.mxu0 0.0
      %869 = vmatprep.subr.mxu0 0.0
      %870 = vmatpush1.msra.mxu0 0.0
      %871 = vmatprep.subr.mxu0 0.0
      %872 = vmatpush1.msra.mxu0 0.0
      %873 = vmatprep.subr.mxu0 0.0
      %874 = vmatpush1.msra.mxu0 0.0
      %875 = vmatprep.subr.mxu0 0.0
      %876 = vmatpush1.msra.mxu0 0.0
      %877 = vmatprep.subr.mxu0 0.0
      %878 = vmatpush1.msra.mxu0 0.0
      %879 = vmatprep.subr.mxu0 0.0
      %880 = vmatpush1.msra.mxu0 0.0
      %881 = vmatprep.subr.mxu0 0.0
      %882 = vmatpush1.msra.mxu0 0.0
      %883 = vmatprep.subr.mxu0 0.0
      %884 = vmatpush1.msra.mxu0 0.0
      %885 = vmatprep.subr.mxu0 0.0
      %886 = vmatpush1.msra.mxu0 0.0
      %887 = vmatprep.subr.mxu0 0.0
      %888 = vmatpush1.msra.mxu0 0.0
      %889 = vmatprep.subr.mxu0 0.0
      %890 = vmatpush1.msra.mxu0 0.0
      %891 = vmatprep.subr.mxu0 0.0
      %892 = vmatpush1.msra.mxu0 0.0
      %893 = vmatprep.mubr.f32.mxu0 0.0
      %894 = vmatmul.mubr.f32.gmra.mrb[0].mxu0 %v598
      %v895 = vpop.f32.mrb[0].mxu0
      %v896 = vadd.f32 0.0, %v895
      %v897 = vpop.f32.mrb[0].mxu0
      %v898 = vadd.f32 0.0, %v897
      %899 = vdwg.mxu0
      %v900 = vadd.f32 %v367, %v369
      %v901 = vadd.f32 %v900, %v438
      %v902 = vadd.f32 %v901, %v440
      %v903 = vadd.f32 %v902, %v509
      %v904 = vadd.f32 %v903, %v511
      %v905 = vadd.f32 %v904, %v580
      %v906 = vadd.f32 %v905, %v582
      %907 = vadd.xlane.f32.xlu0 %v906
      %v908 = vpop.xlane.xlu0 %907
      %v909 = vmul.f32 %v367, %v367
      %v910 = vmul.f32 %v369, %v369
      %v911 = vmul.f32 %v438, %v438
      %v912 = vmul.f32 %v440, %v440
      %v913 = vmul.f32 %v509, %v509
      %v914 = vmul.f32 %v511, %v511
      %v915 = vmul.f32 %v580, %v580
      %v916 = vmul.f32 %v582, %v582
      %v917 = vadd.f32 %v909, %v910
      %v918 = vadd.f32 %v917, %v911
      %v919 = vadd.f32 %v918, %v912
      %v920 = vadd.f32 %v919, %v913
      %v921 = vadd.f32 %v920, %v914
      %v922 = vadd.f32 %v921, %v915
      %v923 = vadd.f32 %v922, %v916
      %924 = vadd.xlane.f32.xlu0 %v923
      %v925 = vpop.xlane.xlu0 %924
      %v926 = vadd.f32 %v683, %v685
      %v927 = vadd.f32 %v926, %v754
      %v928 = vadd.f32 %v927, %v756
      %v929 = vadd.f32 %v928, %v825
      %v930 = vadd.f32 %v929, %v827
      %v931 = vadd.f32 %v930, %v896
      %v932 = vadd.f32 %v931, %v898
      %933 = vadd.xlane.f32.xlu0 %v932
      %v934 = vpop.xlane.xlu0 %933
      %v935 = vmul.f32 %v683, %v683
      %v936 = vmul.f32 %v685, %v685
      %v937 = vmul.f32 %v754, %v754
      %v938 = vmul.f32 %v756, %v756
      %v939 = vmul.f32 %v825, %v825
      %v940 = vmul.f32 %v827, %v827
      %v941 = vmul.f32 %v896, %v896
      %v942 = vmul.f32 %v898, %v898
      %v943 = vadd.f32 %v935, %v936
      %v944 = vadd.f32 %v943, %v937
      %v945 = vadd.f32 %v944, %v938
      %v946 = vadd.f32 %v945, %v939
      %v947 = vadd.f32 %v946, %v940
      %v948 = vadd.f32 %v947, %v941
      %v949 = vadd.f32 %v948, %v942
      %950 = vadd.xlane.f32.xlu0 %v949
      %v951 = vpop.xlane.xlu0 %950
      %vm952 = vcmask 7168
      %v953 = vsel %vm952, %v908, %v925
      %vm954 = vcmask 15360
      %v955 = vsel %vm954, %v953, %v934
      %vm956 = vcmask 23552
      %v957 = vsel %vm956, %v955, %v951
      %v958 = vld [vmem:[%s259] sm:$0xff]
      %v959 = vadd.f32 %v958, %v957
      %960 = vst.msk [vmem:[%s259] sm:$0xff] %vm279, %v959
      %p961 = scmp.lt.s32.totalorder %s19, 1
      %s962 = scalar_select %p961, %s19, 1
      %s963 = smul.addr %s962, 8
      %s964 = scalar_lea.vmem %s4, %s963
      // Predicated region
      $region41: #{attention_block_forward.3} parent=35 // pred_check
        %p965 = pneg %p143
      $region42: #{attention_block_forward.3} parent=35 // pred_check_branch
        %967 = sbr.rel (%p965) target = $region44
      $region43: #{attention_block_forward.3} parent=35 // pred_region
        _
      $region44: #{attention_block_forward.3} parent=35 // pred_fallthru
        _
    $region36: #{attention_block_forward.3} parent=5 // pred_fallthru
      _
    %p968 = scmp.le.s32.totalorder 2, %s10
    // Predicated region
    $region45: #{attention_block_forward.3} parent=5 // pred_check
      %p969 = pneg %p968
    $region46: #{attention_block_forward.3} parent=5 // pred_check_branch
      %971 = sbr.rel (%p969) target = $region48
    $region47: #{attention_block_forward.3} parent=5 // pred_region
      %s972 = ssub.s32 %s10, 2
      // Predicated region
      $region49: #{attention_block_forward.3} parent=47 // pred_check
        %p973 = pneg %p149
      $region50: #{attention_block_forward.3} parent=47 // pred_check_branch
        %975 = sbr.rel (%p973) target = $region52
      $region51: #{attention_block_forward.3} parent=47 // pred_region
        %p976 = scmp.lt.s32.totalorder %s21, 1
        %s977 = scalar_select %p976, %s21, 1
        %s978 = smul.addr %s977, 8
        %s979 = scalar_lea.vmem %s4, %s978
      $region52: #{attention_block_forward.3} parent=47 // pred_fallthru
        _
    $region48: #{attention_block_forward.3} parent=5 // pred_fallthru
      _
  $region6: #{attention_block_forward.3} parent=0 // loop_footer
    %s14 = sadd.s32 1, %s10
  $region7: #{attention_block_forward.3} parent=0 // loop_footer_branch
    %9 = sbr.rel target = $region3
  $region8: #{attention_block_forward.3} parent=0 // loop_exit
    _

// kernel: attention_block_forward.5
$region0: #{attention_block_forward.5}
  #allocation0 [shape = 'u32[]', space=smem, size = 0x4, offset = 0x4, fixed_abs, tag = 'smem constant byte address 0x4 - core index']
  #allocation1 [shape = 'u32[144,128]{1,0:T(1,128)}', space=vmem, size = 0x12000, scoped, tag = 'internal scratch']
  %s0 = inlined_call_operand.vmem [shape: f32[2], index: 0, kind: input, shape index: {}]
  %s1 = inlined_call_operand.vmem [shape: f32[2,4,1024], index: 1, kind: input, shape index: {}]
  %s2 = inlined_call_operand.vmem [shape: f32[2,1,1024], index: 2, kind: input, shape index: {}]
  %s3 = inlined_call_operand.hbm [shape: f32[2,4,1024], index: 3, kind: output, shape index: {}]
  %s4 = sld [smem:[#allocation0]]
  $region49: #{attention_block_forward.5} parent=0
    _
  %s6 = ssub.s32 1, %s4
  %s7 = scalar_select 0, %s6, %s4
  $region1: #{attention_block_forward.5} parent=0
    #allocation2 [shape = 'u8[512]{0}', space=smem, size = 0x200, scoped, tag = 'input window, operand 0, single buffered']
    #allocation3 [shape = 's32[2]{0}', space=sflag, size = 0x8, scoped, tag = 'scoped memory for attention_block_forward.5']
    #allocation4 [shape = 's32[2]{0}', space=sflag, size = 0x8, scoped, tag = 'scoped memory for attention_block_forward.5']
    #allocation5 [shape = 'u8[32768]{0}', space=vmem, size = 0x8000, scoped, tag = 'output window, operand 0']
    %8 = vsyncpa [#allocation4], 0
    %9 = vsyncpa [#allocation3], 0
    %s10 = scalar_lea.sflag [#allocation3], 1
    %11 = vsyncpa %s10, 0
    loop: start=0, step=1, limit=4
    $region2: #{attention_block_forward.5} parent=1 // loop_pre_header
      _
    $region3: #{attention_block_forward.5} parent=1 // loop_header
      %s13 = sphi 0, %s17
      %p14 = scmp.ge.s32.totalorder %s13, 4
      %s20 = sphi 0, %s32
      %s21 = sphi 0, %s28
      %s22 = sphi 0, %s20
      %s23 = sphi 0, %s21
      %s24 = sphi 0, %s22
      %s25 = sphi 0, %s23
      %s33 = sphi 0, %s33
      %s35 = sphi 0, %s33
      %s36 = sphi 0, %s35
      %s50 = sphi 0, %s36
      %s58 = sphi 0, %s60
      %s61 = sphi 0, %s58
      %s62 = sphi 0, %s61
      %s78 = sphi 0, %s62
      %s86 = sphi 0, %s88
      %s89 = sphi 0, %s86
      %s90 = sphi 0, %s89
      %s106 = sphi 0, %s90
      %s114 = sphi 0, %s116
      %s117 = sphi 0, %s114
      %s118 = sphi 0, %s117
      %s134 = sphi 0, %s118
    $region4: #{attention_block_forward.5} parent=1 // loop_header_branch
      %16 = sbr.rel (%p14) target = $region8
    $region5: #{attention_block_forward.5} parent=1 // loop_body
      %s18 = ssub.s32 %s13, 1
      %s19 = ssub.s32 %s13, 2
      %s26 = sadd.s32 1, %s21
      %p27 = scmp.ge.s32.totalorder %s26, 1
      %s28 = scalar_select %p27, 0, %s26
      %s29 = sadd.s32 1, %s20
      %s30 = scalar_select %p27, %s29, %s20
      %p31 = scmp.ge.s32.totalorder %s30, 2
      %s32 = scalar_select %p31, 0, %s30
      %s34 = sadd.s32 %s33, 1
      %p37 = scmp.eq.s32.totalorder %s13, 1
      %p38 = scmp.ne.s32.totalorder %s33, %s35
      %p39 = scmp.eq.s32.totalorder %s13, 0
      %p40 = por %p38, %p39
      %p41 = scmp.ne.s32.totalorder %s33, %s35
      %p42 = scmp.eq.s32.totalorder %s18, 1
      %p43 = por %p41, %p42
      %p44 = scmp.ne.s32.totalorder %s35, %s36
      %p45 = scmp.eq.s32.totalorder %s18, 0
      %p46 = por %p44, %p45
      %p47 = scmp.ne.s32.totalorder %s35, %s36
      %p48 = scmp.eq.s32.totalorder %s19, 1
      %p49 = por %p47, %p48
      %p51 = scmp.ne.s32.totalorder %s36, %s50
      %p52 = scmp.eq.s32.totalorder %s19, 0
      %p53 = por %p51, %p52
      %s54 = ssub.s32 %s20, %s32
      %s55 = ssub.s32 %s21, %s28
      %s56 = sor.u32 %s54, %s55
      %p57 = scmp.eq.s32.totalorder %s56, 0
      %s59 = sadd.s32 %s58, 1
      %s60 = scalar_select %p57, %s58, %s59
      %p63 = pneg %p57
      %p64 = scmp.eq.s32.totalorder %s13, 1
      %p65 = por %p63, %p64
      %p66 = scmp.ne.s32.totalorder %s58, %s61
      %p67 = scmp.eq.s32.totalorder %s13, 0
      %p68 = por %p66, %p67
      %p69 = scmp.ne.s32.totalorder %s58, %s61
      %p70 = scmp.eq.s32.totalorder %s18, 1
      %p71 = por %p69, %p70
      %p72 = scmp.ne.s32.totalorder %s61, %s62
      %p73 = scmp.eq.s32.totalorder %s18, 0
      %p74 = por %p72, %p73
      %p75 = scmp.ne.s32.totalorder %s61, %s62
      %p76 = scmp.eq.s32.totalorder %s19, 1
      %p77 = por %p75, %p76
      %p79 = scmp.ne.s32.totalorder %s62, %s78
      %p80 = scmp.eq.s32.totalorder %s19, 0
      %p81 = por %p79, %p80
      %s82 = ssub.s32 %s20, %s32
      %s83 = ssub.s32 %s21, %s28
      %s84 = sor.u32 %s82, %s83
      %p85 = scmp.eq.s32.totalorder %s84, 0
      %s87 = sadd.s32 %s86, 1
      %s88 = scalar_select %p85, %s86, %s87
      %p91 = pneg %p85
      %p92 = scmp.eq.s32.totalorder %s13, 1
      %p93 = por %p91, %p92
      %p94 = scmp.ne.s32.totalorder %s86, %s89
      %p95 = scmp.eq.s32.totalorder %s13, 0
      %p96 = por %p94, %p95
      %p97 = scmp.ne.s32.totalorder %s86, %s89
      %p98 = scmp.eq.s32.totalorder %s18, 1
      %p99 = por %p97, %p98
      %p100 = scmp.ne.s32.totalorder %s89, %s90
      %p101 = scmp.eq.s32.totalorder %s18, 0
      %p102 = por %p100, %p101
      %p103 = scmp.ne.s32.totalorder %s89, %s90
      %p104 = scmp.eq.s32.totalorder %s19, 1
      %p105 = por %p103, %p104
      %p107 = scmp.ne.s32.totalorder %s90, %s106
      %p108 = scmp.eq.s32.totalorder %s19, 0
      %p109 = por %p107, %p108
      %s110 = ssub.s32 %s20, %s32
      %s111 = ssub.s32 %s21, %s28
      %s112 = sor.u32 %s110, %s111
      %p113 = scmp.eq.s32.totalorder %s112, 0
      %s115 = sadd.s32 %s114, 1
      %s116 = scalar_select %p113, %s114, %s115
      %p119 = pneg %p113
      %p120 = scmp.eq.s32.totalorder %s13, 1
      %p121 = por %p119, %p120
      %p122 = scmp.ne.s32.totalorder %s114, %s117
      %p123 = scmp.eq.s32.totalorder %s13, 0
      %p124 = por %p122, %p123
      %p125 = scmp.ne.s32.totalorder %s114, %s117
      %p126 = scmp.eq.s32.totalorder %s18, 1
      %p127 = por %p125, %p126
      %p128 = scmp.ne.s32.totalorder %s117, %s118
      %p129 = scmp.eq.s32.totalorder %s18, 0
      %p130 = por %p128, %p129
      %p131 = scmp.ne.s32.totalorder %s117, %s118
      %p132 = scmp.eq.s32.totalorder %s19, 1
      %p133 = por %p131, %p132
      %p135 = scmp.ne.s32.totalorder %s118, %s134
      %p136 = scmp.eq.s32.totalorder %s19, 0
      %p137 = por %p135, %p136
      %p138 = scmp.le.s32.totalorder 1, %s13
      %p139 = scmp.lt.s32.totalorder %s13, 3
      %p140 = pnand %p138, %p139
      %p141 = pneg %p140
      // Predicated region
      $region9: #{attention_block_forward.5} parent=5 // pred_check
        _
      $region10: #{attention_block_forward.5} parent=5 // pred_check_branch
        %143 = sbr.rel (%p140) target = $region12
      $region11: #{attention_block_forward.5} parent=5 // pred_region
        %s144 = ssub.s32 %s13, 1
        // Predicated region
        $region13: #{attention_block_forward.5} parent=11 // pred_check
          %p145 = pneg %p46
        $region14: #{attention_block_forward.5} parent=11 // pred_check_branch
          %147 = sbr.rel (%p145) target = $region16
        $region15: #{attention_block_forward.5} parent=11 // pred_region
          %s149 = ssub.s32 16, 16
          %150 = vsyncadd [#allocation4], %s149
          %s152 = sshll.u32 %s0, 4
          %s153 = int_to_ptr.vmem [resolvable:$true] %s152
          %155 = dma.vmem_to_smem %s153, 16, [#allocation2], [#allocation4]
        $region16: #{attention_block_forward.5} parent=11 // pred_fallthru
          _
      $region12: #{attention_block_forward.5} parent=5 // pred_fallthru
        _
      %p156 = scmp.lt.s32.totalorder %s13, 2
      // Predicated region
      $region17: #{attention_block_forward.5} parent=5 // pred_check
        %p157 = pneg %p156
      $region18: #{attention_block_forward.5} parent=5 // pred_check_branch
        %159 = sbr.rel (%p157) target = $region20
      $region19: #{attention_block_forward.5} parent=5 // pred_region
        // Predicated region
        $region21: #{attention_block_forward.5} parent=19 // pred_check
          %p160 = pneg %p68
        $region22: #{attention_block_forward.5} parent=19 // pred_check_branch
          %162 = sbr.rel (%p160) target = $region24
        $region23: #{attention_block_forward.5} parent=19 // pred_region
          %s163 = smul.u32 8, %s21
          %p164 = scmp.lt.s32.totalorder %s20, 1
          %s165 = scalar_select %p164, %s20, 1
          %p166 = scmp.lt.s32.totalorder %s163, 7
          %s167 = scalar_select %p166, %s163, 7
          %s168 = smul.addr %s165, 8
          %s169 = sadd.s32 %s167, %s168
          %s170 = smul.addr %s169, 4
          %s171 = scalar_lea.vmem %s1, %s170
          %s172 = smul.u32 8, %s21
        $region24: #{attention_block_forward.5} parent=19 // pred_fallthru
          _
        // Predicated region
        $region25: #{attention_block_forward.5} parent=19 // pred_check
          %p173 = pneg %p96
        $region26: #{attention_block_forward.5} parent=19 // pred_check_branch
          %175 = sbr.rel (%p173) target = $region28
        $region27: #{attention_block_forward.5} parent=19 // pred_region
          %s176 = smul.u32 8, %s21
          %p177 = scmp.lt.s32.totalorder %s20, 1
          %s178 = scalar_select %p177, %s20, 1
          %p179 = scmp.lt.s32.totalorder %s176, 7
          %s180 = scalar_select %p179, %s176, 7
          %s181 = smul.addr %s178, 8
          %s182 = sadd.s32 %s180, %s181
          %s183 = scalar_lea.vmem %s2, %s182
          %s184 = smul.u32 8, %s21
        $region28: #{attention_block_forward.5} parent=19 // pred_fallthru
          _
      $region20: #{attention_block_forward.5} parent=5 // pred_fallthru
        _
      %p185 = scmp.le.s32.totalorder 1, %s13
      %p186 = scmp.lt.s32.totalorder %s13, 3
      %p187 = pnand %p185, %p186
      %p188 = pneg %p187
      // Predicated region
      $region29: #{attention_block_forward.5} parent=5 // pred_check
        _
      $region30: #{attention_block_forward.5} parent=5 // pred_check_branch
        %190 = sbr.rel (%p187) target = $region32
      $region31: #{attention_block_forward.5} parent=5 // pred_region
        %s191 = ssub.s32 %s13, 1
        // Predicated region
        $region33: #{attention_block_forward.5} parent=31 // pred_check
          %p192 = pneg %p46
        $region34: #{attention_block_forward.5} parent=31 // pred_check_branch
          %194 = sbr.rel (%p192) target = $region36
        $region35: #{attention_block_forward.5} parent=31 // pred_region
          %195 = dma.done [#allocation4], 16
        $region36: #{attention_block_forward.5} parent=31 // pred_fallthru
          _
        %196 = sfence
        %p197 = pneg %p46
        %p198 = pneg %p43
        %s199 = smul.u32 8, %s23
        %p200 = scmp.lt.s32.totalorder %s22, 1
        %s201 = scalar_select %p200, %s22, 1
        %p202 = scmp.lt.s32.totalorder %s199, 7
        %s203 = scalar_select %p202, %s199, 7
        %s204 = smul.addr %s201, 8
        %s205 = sadd.s32 %s203, %s204
        %s206 = smul.addr %s205, 4
        %s207 = scalar_lea.vmem %s1, %s206
        %p208 = pneg %p74
        %p209 = pneg %p71
        %s210 = smul.u32 8, %s23
        %p211 = scmp.lt.s32.totalorder %s22, 1
        %s212 = scalar_select %p211, %s22, 1
        %p213 = scmp.lt.s32.totalorder %s210, 7
        %s214 = scalar_select %p213, %s210, 7
        %s215 = smul.addr %s212, 8
        %s216 = sadd.s32 %s214, %s215
        %s217 = scalar_lea.vmem %s2, %s216
        %p218 = pneg %p102
        %p219 = pneg %p99
        %p220 = pneg %p130
        %p221 = pneg %p127
        %s222 = sand.u32 %s117, 1
        %s223 = scalar_lea.sflag [#allocation3], %s222
        %s224 = sand.u32 %s117, 1
        %s225 = smul.addr %s224, 32
        %s226 = scalar_lea.vmem [#allocation5], %s225
        %s227 = smul.u32 8, %s23
        %p228 = scmp.lt.s32.totalorder %s22, 1
        %s229 = scalar_select %p228, %s22, 1
        %p230 = scmp.lt.s32.totalorder %s227, 7
        %s231 = scalar_select %p230, %s227, 7
        %s232 = smul.addr %s229, 8
        %s233 = sadd.s32 %s231, %s232
        %s234 = smul.addr %s233, 4
        %s235 = scalar_lea.vmem %s1, %s234
        %s236 = smul.u32 8, %s23
        %s237 = smul.u32 8, %s23
        %p238 = scmp.lt.s32.totalorder %s22, 1
        %s239 = scalar_select %p238, %s22, 1
        %p240 = scmp.lt.s32.totalorder %s237, 7
        %s241 = scalar_select %p240, %s237, 7
        %s242 = smul.addr %s239, 8
        %s243 = sadd.s32 %s241, %s242
        %s244 = scalar_lea.vmem %s2, %s243
        %s245 = smul.u32 8, %s23
        %s246 = smul.u32 8, %s23
        %v247 = vld [vmem:[%s244] sm:$0xff]
        %s248 = sld [smem:[#allocation2]]
        %v249 = vstv %s248
        %v250 = vmul.f32 %v247, %v249
        %s251 = sld [smem:[#allocation2 + $0x1]]
        %v252 = vstv %s251
        %v253 = vadd.f32 %v250, %v252
        %v254 = vxor.u32 %v253, 2147483648
        %v255 = vmul.f32 %v254, 1.442695
        %v256 = vpow.pop %v255
        %v257 = vadd.f32 %v256, 1.0
        %v258 = vrcp.pop %v257
        %v259 = vmul.f32 1.0, %v258
        %v260 = vld [vmem:[%s235] sm:$0xff]
        %v261 = vld [vmem:[%s235 + $0x8] sm:$0xff]
        %v262 = vld [vmem:[%s235 + $0x10] sm:$0xff]
        %v263 = vld [vmem:[%s235 + $0x18] sm:$0xff]
        %v265 = vlaneseq
        %v266 = vshrl.u32 %v265, 7
        %v267 = vsub.s32 0, %v266
        %v268 = vrot.slane %v259, %v267
        %v269 = vlaneseq
        %v270 = vshrl.u32 %v269, 7
        %v271 = vsub.s32 1, %v270
        %v272 = vrot.slane %v259, %v271
        %v273 = vlaneseq
        %v274 = vshrl.u32 %v273, 7
        %v275 = vsub.s32 2, %v274
        %v276 = vrot.slane %v259, %v275
        %v277 = vlaneseq
        %v278 = vshrl.u32 %v277, 7
        %v279 = vsub.s32 3, %v278
        %v280 = vrot.slane %v259, %v279
        %v281 = vlaneseq
        %v282 = vshrl.u32 %v281, 7
        %v283 = vsub.s32 4, %v282
        %v284 = vrot.slane %v259, %v283
        %v285 = vlaneseq
        %v286 = vshrl.u32 %v285, 7
        %v287 = vsub.s32 5, %v286
        %v288 = vrot.slane %v259, %v287
        %v289 = vlaneseq
        %v290 = vshrl.u32 %v289, 7
        %v291 = vsub.s32 6, %v290
        %v292 = vrot.slane %v259, %v291
        %v293 = vlaneseq
        %v294 = vshrl.u32 %v293, 7
        %v295 = vsub.s32 7, %v294
        %v296 = vrot.slane %v259, %v295
        %v297 = vcombine.low %v268, %v272
        %v298 = vcombine.low %v276, %v280
        %v299 = vcombine.low %v284, %v288
        %v300 = vcombine.low %v292, %v296
        %v305 = vmul.f32 %v260, %v297
        %v306 = vmul.f32 %v261, %v298
        %v307 = vmul.f32 %v262, %v299
        %v308 = vmul.f32 %v263, %v300
        %309 = vst [vmem:[%s226] sm:$0xff] %v305
        %310 = vst [vmem:[%s226 + $0x8] sm:$0xff] %v306
        %311 = vst [vmem:[%s226 + $0x10] sm:$0xff] %v307
        %312 = vst [vmem:[%s226 + $0x18] sm:$0xff] %v308
        %s313 = sand.u32 %s117, 1
        %s314 = scalar_lea.sflag [#allocation3], %s313
        %s315 = sand.u32 %s117, 1
        %s316 = smul.addr %s315, 32
        %s317 = scalar_lea.vmem [#allocation5], %s316
        // Predicated region
        $region37: #{attention_block_forward.5} parent=31 // pred_check
          %p318 = pneg %p127
        $region38: #{attention_block_forward.5} parent=31 // pred_check_branch
          %320 = sbr.rel (%p318) target = $region40
        $region39: #{attention_block_forward.5} parent=31 // pred_region
          %s321 = smul.u32 8, %s23
          %s323 = ssub.s32 512, 512
          %324 = vsyncadd %s314, %s323
          %s325 = smul.addr %s22, 8
          %s326 = sadd.s32 %s321, %s325
          %s327 = smul.addr %s326, 64
          %s328 = scalar_lea.hbm %s3, %s327
          %s330 = sshll.u32 %s317, 4
          %s331 = int_to_ptr.vmem [resolvable:$true] %s330
          %333 = dma.vmem_to_hbm [thread:$0]  %s331, 512, %s328, %s314
        $region40: #{attention_block_forward.5} parent=31 // pred_fallthru
          _
      $region32: #{attention_block_forward.5} parent=5 // pred_fallthru
        _
      %p334 = scmp.le.s32.totalorder 2, %s13
      // Predicated region
      $region41: #{attention_block_forward.5} parent=5 // pred_check
        %p335 = pneg %p334
      $region42: #{attention_block_forward.5} parent=5 // pred_check_branch
        %337 = sbr.rel (%p335) target = $region44
      $region43: #{attention_block_forward.5} parent=5 // pred_region
        %s338 = ssub.s32 %s13, 2
        // Predicated region
        $region45: #{attention_block_forward.5} parent=43 // pred_check
          %p339 = pneg %p133
        $region46: #{attention_block_forward.5} parent=43 // pred_check_branch
          %341 = sbr.rel (%p339) target = $region48
        $region47: #{attention_block_forward.5} parent=43 // pred_region
          %s342 = sand.u32 %s118, 1
          %s343 = scalar_lea.sflag [#allocation3], %s342
          %s344 = sand.u32 %s118, 1
          %s345 = smul.addr %s344, 32
          %s346 = scalar_lea.vmem [#allocation5], %s345
          %347 = dma.done %s343, 512
        $region48: #{attention_block_forward.5} parent=43 // pred_fallthru
          _
      $region44: #{attention_block_forward.5} parent=5 // pred_fallthru
        _
    $region6: #{attention_block_forward.5} parent=1 // loop_footer
      %s17 = sadd.s32 1, %s13
    $region7: #{attention_block_forward.5} parent=1 // loop_footer_branch
      %12 = sbr.rel target = $region3
    $region8: #{attention_block_forward.5} parent=1 // loop_exit
      _
    %348 = vsyncpa [#allocation3], 1
    %s349 = scalar_lea.sflag [#allocation3], 1
    %350 = vsyncpa %s349, 1
    %351 = vsyncpa [#allocation4], 1
    %s352 = scalar_lea.sflag [#allocation4], 1
    %353 = vsyncpa %s352, 1

// kernel: attention_block_forward.4
$region0: #{attention_block_forward.4}
  #allocation0 [shape = 'u32[]', space=smem, size = 0x4, offset = 0x4, fixed_abs, tag = 'smem constant byte address 0x4 - core index']
  #allocation1 [shape = 'u32[144,128]{1,0:T(1,128)}', space=vmem, size = 0x12000, scoped, tag = 'internal scratch']
  #allocation2 [shape = 'f32[1,1]{1,0:T(1,128)S(1)}', space=vmem, size = 0x200, scoped, tag = 'scoped memory for attention_block_forward.4']
  %s0 = inlined_call_operand.vmem [shape: f32[2,4,1024], index: 0, kind: input, shape index: {}]
  %s1 = inlined_call_operand.vmem [shape: f32[2,4,1024], index: 1, kind: input, shape index: {}]
  %s2 = inlined_call_operand.vmem [shape: f32[8,4], index: 2, kind: input, shape index: {}]
  %s3 = inlined_call_operand.vmem [shape: f32[8,4], index: 3, kind: input, shape index: {}]
  %s4 = inlined_call_operand.vmem [shape: f32[8,1], index: 4, kind: input, shape index: {}]
  %s5 = inlined_call_operand.vmem [shape: f32[8,1], index: 5, kind: input, shape index: {}]
  %s6 = inlined_call_operand.<no memory space> [shape: f32[1,1], index: 6, kind: input, shape index: {}]
  %s7 = inlined_call_operand.vmem [shape: f32[2,1,1024], index: 7, kind: output, shape index: {0}]
  %s8 = inlined_call_operand.vmem [shape: f32[2,1,2], index: 8, kind: output, shape index: {1}]
  %9 = xla_tuple %s7, %s8
  %s10 = sld [smem:[#allocation0]]
  $region73: #{attention_block_forward.4} parent=0
    _
  %s12 = ssub.s32 1, %s10
  %s13 = scalar_select 0, %s12, %s10
  %v14 = vstv %s6
  %15 = vst [vmem:[#allocation2] sm:$0x1] %v14
  loop: start=0, step=1, limit=4
  $region2: #{attention_block_forward.4} parent=0 // loop_pre_header
    _
  $region3: #{attention_block_forward.4} parent=0 // loop_header
    %s17 = sphi 0, %s21
    %p18 = scmp.ge.s32.totalorder %s17, 4
    %s24 = sphi 0, %s36
    %s25 = sphi 0, %s32
    %s26 = sphi 0, %s24
    %s27 = sphi 0, %s25
    %s28 = sphi 0, %s26
    %s29 = sphi 0, %s27
    %s41 = sphi 0, %s43
    %s44 = sphi 0, %s41
    %s45 = sphi 0, %s44
    %s61 = sphi 0, %s45
    %s69 = sphi 0, %s71
    %s72 = sphi 0, %s69
    %s73 = sphi 0, %s72
    %s89 = sphi 0, %s73
    %s93 = sphi 0, %s93
    %s95 = sphi 0, %s93
    %s96 = sphi 0, %s95
    %s110 = sphi 0, %s96
    %s114 = sphi 0, %s114
    %s116 = sphi 0, %s114
    %s117 = sphi 0, %s116
    %s131 = sphi 0, %s117
    %s135 = sphi 0, %s135
    %s137 = sphi 0, %s135
    %s138 = sphi 0, %s137
    %s152 = sphi 0, %s138
    %s156 = sphi 0, %s156
    %s158 = sphi 0, %s156
    %s159 = sphi 0, %s158
    %s173 = sphi 0, %s159
    %s177 = sphi 0, %s177
    %s179 = sphi 0, %s177
    %s180 = sphi 0, %s179
    %s194 = sphi 0, %s180
    %s202 = sphi 0, %s204
    %s205 = sphi 0, %s202
    %s206 = sphi 0, %s205
    %s222 = sphi 0, %s206
    %s228 = sphi 0, %s230
    %s231 = sphi 0, %s228
    %s232 = sphi 0, %s231
    %s248 = sphi 0, %s232
  $region4: #{attention_block_forward.4} parent=0 // loop_header_branch
    %20 = sbr.rel (%p18) target = $region8
  $region5: #{attention_block_forward.4} parent=0 // loop_body
    %s22 = ssub.s32 %s17, 1
    %s23 = ssub.s32 %s17, 2
    %s30 = sadd.s32 1, %s25
    %p31 = scmp.ge.s32.totalorder %s30, 1
    %s32 = scalar_select %p31, 0, %s30
    %s33 = sadd.s32 1, %s24
    %s34 = scalar_select %p31, %s33, %s24
    %p35 = scmp.ge.s32.totalorder %s34, 2
    %s36 = scalar_select %p35, 0, %s34
    %s37 = ssub.s32 %s24, %s36
    %s38 = ssub.s32 %s25, %s32
    %s39 = sor.u32 %s37, %s38
    %p40 = scmp.eq.s32.totalorder %s39, 0
    %s42 = sadd.s32 %s41, 1
    %s43 = scalar_select %p40, %s41, %s42
    %p46 = pneg %p40
    %p47 = scmp.eq.s32.totalorder %s17, 1
    %p48 = por %p46, %p47
    %p49 = scmp.ne.s32.totalorder %s41, %s44
    %p50 = scmp.eq.s32.totalorder %s17, 0
    %p51 = por %p49, %p50
    %p52 = scmp.ne.s32.totalorder %s41, %s44
    %p53 = scmp.eq.s32.totalorder %s22, 1
    %p54 = por %p52, %p53
    %p55 = scmp.ne.s32.totalorder %s44, %s45
    %p56 = scmp.eq.s32.totalorder %s22, 0
    %p57 = por %p55, %p56
    %p58 = scmp.ne.s32.totalorder %s44, %s45
    %p59 = scmp.eq.s32.totalorder %s23, 1
    %p60 = por %p58, %p59
    %p62 = scmp.ne.s32.totalorder %s45, %s61
    %p63 = scmp.eq.s32.totalorder %s23, 0
    %p64 = por %p62, %p63
    %s65 = ssub.s32 %s24, %s36
    %s66 = ssub.s32 %s25, %s32
    %s67 = sor.u32 %s65, %s66
    %p68 = scmp.eq.s32.totalorder %s67, 0
    %s70 = sadd.s32 %s69, 1
    %s71 = scalar_select %p68, %s69, %s70
    %p74 = pneg %p68
    %p75 = scmp.eq.s32.totalorder %s17, 1
    %p76 = por %p74, %p75
    %p77 = scmp.ne.s32.totalorder %s69, %s72
    %p78 = scmp.eq.s32.totalorder %s17, 0
    %p79 = por %p77, %p78
    %p80 = scmp.ne.s32.totalorder %s69, %s72
    %p81 = scmp.eq.s32.totalorder %s22, 1
    %p82 = por %p80, %p81
    %p83 = scmp.ne.s32.totalorder %s72, %s73
    %p84 = scmp.eq.s32.totalorder %s22, 0
    %p85 = por %p83, %p84
    %p86 = scmp.ne.s32.totalorder %s72, %s73
    %p87 = scmp.eq.s32.totalorder %s23, 1
    %p88 = por %p86, %p87
    %p90 = scmp.ne.s32.totalorder %s73, %s89
    %p91 = scmp.eq.s32.totalorder %s23, 0
    %p92 = por %p90, %p91
    %s94 = sadd.s32 %s93, 1
    %p97 = scmp.eq.s32.totalorder %s17, 1
    %p98 = scmp.ne.s32.totalorder %s93, %s95
    %p99 = scmp.eq.s32.totalorder %s17, 0
    %p100 = por %p98, %p99
    %p101 = scmp.ne.s32.totalorder %s93, %s95
    %p102 = scmp.eq.s32.totalorder %s22, 1
    %p103 = por %p101, %p102
    %p104 = scmp.ne.s32.totalorder %s95, %s96
    %p105 = scmp.eq.s32.totalorder %s22, 0
    %p106 = por %p104, %p105
    %p107 = scmp.ne.s32.totalorder %s95, %s96
    %p108 = scmp.eq.s32.totalorder %s23, 1
    %p109 = por %p107, %p108
    %p111 = scmp.ne.s32.totalorder %s96, %s110
    %p112 = scmp.eq.s32.totalorder %s23, 0
    %p113 = por %p111, %p112
    %s115 = sadd.s32 %s114, 1
    %p118 = scmp.eq.s32.totalorder %s17, 1
    %p119 = scmp.ne.s32.totalorder %s114, %s116
    %p120 = scmp.eq.s32.totalorder %s17, 0
    %p121 = por %p119, %p120
    %p122 = scmp.ne.s32.totalorder %s114, %s116
    %p123 = scmp.eq.s32.totalorder %s22, 1
    %p124 = por %p122, %p123
    %p125 = scmp.ne.s32.totalorder %s116, %s117
    %p126 = scmp.eq.s32.totalorder %s22, 0
    %p127 = por %p125, %p126
    %p128 = scmp.ne.s32.totalorder %s116, %s117
    %p129 = scmp.eq.s32.totalorder %s23, 1
    %p130 = por %p128, %p129
    %p132 = scmp.ne.s32.totalorder %s117, %s131
    %p133 = scmp.eq.s32.totalorder %s23, 0
    %p134 = por %p132, %p133
    %s136 = sadd.s32 %s135, 1
    %p139 = scmp.eq.s32.totalorder %s17, 1
    %p140 = scmp.ne.s32.totalorder %s135, %s137
    %p141 = scmp.eq.s32.totalorder %s17, 0
    %p142 = por %p140, %p141
    %p143 = scmp.ne.s32.totalorder %s135, %s137
    %p144 = scmp.eq.s32.totalorder %s22, 1
    %p145 = por %p143, %p144
    %p146 = scmp.ne.s32.totalorder %s137, %s138
    %p147 = scmp.eq.s32.totalorder %s22, 0
    %p148 = por %p146, %p147
    %p149 = scmp.ne.s32.totalorder %s137, %s138
    %p150 = scmp.eq.s32.totalorder %s23, 1
    %p151 = por %p149, %p150
    %p153 = scmp.ne.s32.totalorder %s138, %s152
    %p154 = scmp.eq.s32.totalorder %s23, 0
    %p155 = por %p153, %p154
    %s157 = sadd.s32 %s156, 1
    %p160 = scmp.eq.s32.totalorder %s17, 1
    %p161 = scmp.ne.s32.totalorder %s156, %s158
    %p162 = scmp.eq.s32.totalorder %s17, 0
    %p163 = por %p161, %p162
    %p164 = scmp.ne.s32.totalorder %s156, %s158
    %p165 = scmp.eq.s32.totalorder %s22, 1
    %p166 = por %p164, %p165
    %p167 = scmp.ne.s32.totalorder %s158, %s159
    %p168 = scmp.eq.s32.totalorder %s22, 0
    %p169 = por %p167, %p168
    %p170 = scmp.ne.s32.totalorder %s158, %s159
    %p171 = scmp.eq.s32.totalorder %s23, 1
    %p172 = por %p170, %p171
    %p174 = scmp.ne.s32.totalorder %s159, %s173
    %p175 = scmp.eq.s32.totalorder %s23, 0
    %p176 = por %p174, %p175
    %s178 = sadd.s32 %s177, 1
    %p181 = scmp.eq.s32.totalorder %s17, 1
    %p182 = scmp.ne.s32.totalorder %s177, %s179
    %p183 = scmp.eq.s32.totalorder %s17, 0
    %p184 = por %p182, %p183
    %p185 = scmp.ne.s32.totalorder %s177, %s179
    %p186 = scmp.eq.s32.totalorder %s22, 1
    %p187 = por %p185, %p186
    %p188 = scmp.ne.s32.totalorder %s179, %s180
    %p189 = scmp.eq.s32.totalorder %s22, 0
    %p190 = por %p188, %p189
    %p191 = scmp.ne.s32.totalorder %s179, %s180
    %p192 = scmp.eq.s32.totalorder %s23, 1
    %p193 = por %p191, %p192
    %p195 = scmp.ne.s32.totalorder %s180, %s194
    %p196 = scmp.eq.s32.totalorder %s23, 0
    %p197 = por %p195, %p196
    %s198 = ssub.s32 %s24, %s36
    %s199 = ssub.s32 %s25, %s32
    %s200 = sor.u32 %s198, %s199
    %p201 = scmp.eq.s32.totalorder %s200, 0
    %s203 = sadd.s32 %s202, 1
    %s204 = scalar_select %p201, %s202, %s203
    %p207 = pneg %p201
    %p208 = scmp.eq.s32.totalorder %s17, 1
    %p209 = por %p207, %p208
    %p210 = scmp.ne.s32.totalorder %s202, %s205
    %p211 = scmp.eq.s32.totalorder %s17, 0
    %p212 = por %p210, %p211
    %p213 = scmp.ne.s32.totalorder %s202, %s205
    %p214 = scmp.eq.s32.totalorder %s22, 1
    %p215 = por %p213, %p214
    %p216 = scmp.ne.s32.totalorder %s205, %s206
    %p217 = scmp.eq.s32.totalorder %s22, 0
    %p218 = por %p216, %p217
    %p219 = scmp.ne.s32.totalorder %s205, %s206
    %p220 = scmp.eq.s32.totalorder %s23, 1
    %p221 = por %p219, %p220
    %p223 = scmp.ne.s32.totalorder %s206, %s222
    %p224 = scmp.eq.s32.totalorder %s23, 0
    %p225 = por %p223, %p224
    %s226 = ssub.s32 %s24, %s36
    %p227 = scmp.eq.s32.totalorder %s226, 0
    %s229 = sadd.s32 %s228, 1
    %s230 = scalar_select %p227, %s228, %s229
    %p233 = pneg %p227
    %p234 = scmp.eq.s32.totalorder %s17, 1
    %p235 = por %p233, %p234
    %p236 = scmp.ne.s32.totalorder %s228, %s231
    %p237 = scmp.eq.s32.totalorder %s17, 0
    %p238 = por %p236, %p237
    %p239 = scmp.ne.s32.totalorder %s228, %s231
    %p240 = scmp.eq.s32.totalorder %s22, 1
    %p241 = por %p239, %p240
    %p242 = scmp.ne.s32.totalorder %s231, %s232
    %p243 = scmp.eq.s32.totalorder %s22, 0
    %p244 = por %p242, %p243
    %p245 = scmp.ne.s32.totalorder %s231, %s232
    %p246 = scmp.eq.s32.totalorder %s23, 1
    %p247 = por %p245, %p246
    %p249 = scmp.ne.s32.totalorder %s232, %s248
    %p250 = scmp.eq.s32.totalorder %s23, 0
    %p251 = por %p249, %p250
    %p252 = scmp.le.s32.totalorder 1, %s17
    %p253 = scmp.lt.s32.totalorder %s17, 3
    %p254 = pnand %p252, %p253
    %p255 = pneg %p254
    // Predicated region
    $region9: #{attention_block_forward.4} parent=5 // pred_check
      _
    $region10: #{attention_block_forward.4} parent=5 // pred_check_branch
      %257 = sbr.rel (%p254) target = $region12
    $region11: #{attention_block_forward.4} parent=5 // pred_region
      %s258 = ssub.s32 %s17, 1
      // Predicated region
      $region13: #{attention_block_forward.4} parent=11 // pred_check
        %p259 = pneg %p106
      $region14: #{attention_block_forward.4} parent=11 // pred_check_branch
        %261 = sbr.rel (%p259) target = $region16
      $region15: #{attention_block_forward.4} parent=11 // pred_region
        _
      $region16: #{attention_block_forward.4} parent=11 // pred_fallthru
        _
      // Predicated region
      $region17: #{attention_block_forward.4} parent=11 // pred_check
        %p262 = pneg %p127
      $region18: #{attention_block_forward.4} parent=11 // pred_check_branch
        %264 = sbr.rel (%p262) target = $region20
      $region19: #{attention_block_forward.4} parent=11 // pred_region
        _
      $region20: #{attention_block_forward.4} parent=11 // pred_fallthru
        _
      // Predicated region
      $region21: #{attention_block_forward.4} parent=11 // pred_check
        %p265 = pneg %p148
      $region22: #{attention_block_forward.4} parent=11 // pred_check_branch
        %267 = sbr.rel (%p265) target = $region24
      $region23: #{attention_block_forward.4} parent=11 // pred_region
        _
      $region24: #{attention_block_forward.4} parent=11 // pred_fallthru
        _
      // Predicated region
      $region25: #{attention_block_forward.4} parent=11 // pred_check
        %p268 = pneg %p169
      $region26: #{attention_block_forward.4} parent=11 // pred_check_branch
        %270 = sbr.rel (%p268) target = $region28
      $region27: #{attention_block_forward.4} parent=11 // pred_region
        _
      $region28: #{attention_block_forward.4} parent=11 // pred_fallthru
        _
      // Predicated region
      $region29: #{attention_block_forward.4} parent=11 // pred_check
        %p271 = pneg %p190
      $region30: #{attention_block_forward.4} parent=11 // pred_check_branch
        %273 = sbr.rel (%p271) target = $region32
      $region31: #{attention_block_forward.4} parent=11 // pred_region
        _
      $region32: #{attention_block_forward.4} parent=11 // pred_fallthru
        _
    $region12: #{attention_block_forward.4} parent=5 // pred_fallthru
      _
    %p274 = scmp.lt.s32.totalorder %s17, 2
    // Predicated region
    $region33: #{attention_block_forward.4} parent=5 // pred_check
      %p275 = pneg %p274
    $region34: #{attention_block_forward.4} parent=5 // pred_check_branch
      %277 = sbr.rel (%p275) target = $region36
    $region35: #{attention_block_forward.4} parent=5 // pred_region
      // Predicated region
      $region37: #{attention_block_forward.4} parent=35 // pred_check
        %p278 = pneg %p51
      $region38: #{attention_block_forward.4} parent=35 // pred_check_branch
        %280 = sbr.rel (%p278) target = $region40
      $region39: #{attention_block_forward.4} parent=35 // pred_region
        %s281 = smul.u32 8, %s25
        %p282 = scmp.lt.s32.totalorder %s24, 1
        %s283 = scalar_select %p282, %s24, 1
        %p284 = scmp.lt.s32.totalorder %s281, 7
        %s285 = scalar_select %p284, %s281, 7
        %s286 = smul.addr %s283, 8
        %s287 = sadd.s32 %s285, %s286
        %s288 = smul.addr %s287, 4
        %s289 = scalar_lea.vmem %s0, %s288
        %s290 = smul.u32 8, %s25
      $region40: #{attention_block_forward.4} parent=35 // pred_fallthru
        _
      // Predicated region
      $region41: #{attention_block_forward.4} parent=35 // pred_check
        %p291 = pneg %p79
      $region42: #{attention_block_forward.4} parent=35 // pred_check_branch
        %293 = sbr.rel (%p291) target = $region44
      $region43: #{attention_block_forward.4} parent=35 // pred_region
        %s294 = smul.u32 8, %s25
        %p295 = scmp.lt.s32.totalorder %s24, 1
        %s296 = scalar_select %p295, %s24, 1
        %p297 = scmp.lt.s32.totalorder %s294, 7
        %s298 = scalar_select %p297, %s294, 7
        %s299 = smul.addr %s296, 8
        %s300 = sadd.s32 %s298, %s299
        %s301 = smul.addr %s300, 4
        %s302 = scalar_lea.vmem %s1, %s301
        %s303 = smul.u32 8, %s25
      $region44: #{attention_block_forward.4} parent=35 // pred_fallthru
        _
    $region36: #{attention_block_forward.4} parent=5 // pred_fallthru
      _
    %p304 = scmp.le.s32.totalorder 1, %s17
    %p305 = scmp.lt.s32.totalorder %s17, 3
    %p306 = pnand %p304, %p305
    %p307 = pneg %p306
    // Predicated region
    $region45: #{attention_block_forward.4} parent=5 // pred_check
      _
    $region46: #{attention_block_forward.4} parent=5 // pred_check_branch
      %309 = sbr.rel (%p306) target = $region48
    $region47: #{attention_block_forward.4} parent=5 // pred_region
      %s310 = ssub.s32 %s17, 1
      %s311 = smul.u32 8, %s27
      %p312 = scmp.lt.s32.totalorder %s26, 1
      %s313 = scalar_select %p312, %s26, 1
      %p314 = scmp.lt.s32.totalorder %s311, 7
      %s315 = scalar_select %p314, %s311, 7
      %s316 = smul.addr %s313, 8
      %s317 = sadd.s32 %s315, %s316
      %s318 = smul.addr %s317, 4
      %s319 = scalar_lea.vmem %s0, %s318
      %p320 = pneg %p57
      %p321 = pneg %p54
      %s322 = smul.u32 8, %s27
      %p323 = scmp.lt.s32.totalorder %s26, 1
      %s324 = scalar_select %p323, %s26, 1
      %p325 = scmp.lt.s32.totalorder %s322, 7
      %s326 = scalar_select %p325, %s322, 7
      %s327 = smul.addr %s324, 8
      %s328 = sadd.s32 %s326, %s327
      %s329 = smul.addr %s328, 4
      %s330 = scalar_lea.vmem %s1, %s329
      %p331 = pneg %p85
      %p332 = pneg %p82
      %p333 = pneg %p106
      %p334 = pneg %p103
      %p335 = pneg %p127
      %p336 = pneg %p124
      %p337 = pneg %p148
      %p338 = pneg %p145
      %p339 = pneg %p169
      %p340 = pneg %p166
      %p341 = pneg %p190
      %p342 = pneg %p187
      %p343 = pneg %p218
      %p344 = pneg %p215
      %s345 = smul.u32 8, %s27
      %p346 = scmp.lt.s32.totalorder %s26, 1
      %s347 = scalar_select %p346, %s26, 1
      %p348 = scmp.lt.s32.totalorder %s345, 7
      %s349 = scalar_select %p348, %s345, 7
      %s350 = smul.addr %s347, 8
      %s351 = sadd.s32 %s349, %s350
      %s352 = scalar_lea.vmem %s7, %s351
      %p353 = pneg %p244
      %p354 = pneg %p241
      %p355 = scmp.lt.s32.totalorder %s26, 1
      %s356 = scalar_select %p355, %s26, 1
      %s357 = scalar_lea.vmem %s8, %s356
      %s358 = smul.u32 8, %s27
      %p359 = scmp.lt.s32.totalorder %s26, 1
      %s360 = scalar_select %p359, %s26, 1
      %p361 = scmp.lt.s32.totalorder %s358, 7
      %s362 = scalar_select %p361, %s358, 7
      %s363 = smul.addr %s360, 8
      %s364 = sadd.s32 %s362, %s363
      %s365 = smul.addr %s364, 4
      %s366 = scalar_lea.vmem %s0, %s365
      %s367 = smul.u32 8, %s27
      %s368 = smul.u32 8, %s27
      %p369 = scmp.lt.s32.totalorder %s26, 1
      %s370 = scalar_select %p369, %s26, 1
      %p371 = scmp.lt.s32.totalorder %s368, 7
      %s372 = scalar_select %p371, %s368, 7
      %s373 = smul.addr %s370, 8
      %s374 = sadd.s32 %s372, %s373
      %s375 = smul.addr %s374, 4
      %s376 = scalar_lea.vmem %s1, %s375
      %s377 = smul.u32 8, %s27
      %s378 = smul.u32 8, %s27
      %p379 = scmp.lt.s32.totalorder %s26, 1
      %s380 = scalar_select %p379, %s26, 1
      %p381 = scmp.lt.s32.totalorder %s378, 7
      %s382 = scalar_select %p381, %s378, 7
      %s383 = smul.addr %s380, 8
      %s384 = sadd.s32 %s382, %s383
      %s385 = scalar_lea.vmem %s7, %s384
      %s386 = smul.u32 8, %s27
      %p387 = scmp.lt.s32.totalorder %s26, 1
      %s388 = scalar_select %p387, %s26, 1
      %s389 = scalar_lea.vmem %s8, %s388
      %p390 = scmp.eq.s32.totalorder %s27, 0
      // Predicated region
      $region49: #{attention_block_forward.4} parent=47 // pred_check
        %p391 = pneg %p390
      $region50: #{attention_block_forward.4} parent=47 // pred_check_branch
        %393 = sbr.rel (%p391) target = $region52
      $region51: #{attention_block_forward.4} parent=47 // pred_region
        %vm394 = vcmask 8192
        %395 = vst.msk [vmem:[%s389] sm:$0x1] %vm394, 0.0
      $region52: #{attention_block_forward.4} parent=47 // pred_fallthru
        _
      %v396 = vld [vmem:[%s2] sm:$0xff]
      %v397 = vld [vmem:[%s366] sm:$0xff]
      %v398 = vld [vmem:[%s366 + $0x8] sm:$0xff]
      %v399 = vld [vmem:[%s366 + $0x10] sm:$0xff]
      %v400 = vld [vmem:[%s366 + $0x18] sm:$0xff]
      %v401 = vld [vmem:[%s3] sm:$0xff]
      %v402 = vld [vmem:[%s376] sm:$0xff]
      %v403 = vld [vmem:[%s376 + $0x8] sm:$0xff]
      %v404 = vld [vmem:[%s376 + $0x10] sm:$0xff]
      %v405 = vld [vmem:[%s376 + $0x18] sm:$0xff]
      %v410 = vcombine.high %v402, %v402
      %v411 = vcombine.high %v403, %v403
      %v412 = vcombine.high %v404, %v404
      %v413 = vcombine.high %v405, %v405
      %vm414 = vcmask 31744
      %v416 = vsel %vm414, %v401, 0
      %vm418 = vcmask 1043456
      %v419 = vsel %vm418, %v402, 0
      %v421 = vsel %vm418, %v410, 0
      %v423 = vsel %vm418, %v403, 0
      %v425 = vsel %vm418, %v411, 0
      %v427 = vsel %vm418, %v404, 0
      %v429 = vsel %vm418, %v412, 0
      %v431 = vsel %vm418, %v405, 0
      %v433 = vsel %vm418, %v413, 0
      %435 = vmatprep.subr.mxu0 %v421
      %436 = vmatpush1.msra.mxu0 %v419
      %437 = vmatprep.subr.mxu0 0.0
      %438 = vmatpush1.msra.mxu0 0.0
      %439 = vmatprep.subr.mxu0 0.0
      %440 = vmatpush1.msra.mxu0 0.0
      %441 = vmatprep.subr.mxu0 0.0
      %442 = vmatpush1.msra.mxu0 0.0
      %443 = vmatprep.subr.mxu0 0.0
      %444 = vmatpush1.msra.mxu0 0.0
      %445 = vmatprep.subr.mxu0 0.0
      %446 = vmatpush1.msra.mxu0 0.0
      %447 = vmatprep.subr.mxu0 0.0
      %448 = vmatpush1.msra.mxu0 0.0
      %449 = vmatprep.subr.mxu0 0.0
      %450 = vmatpush1.msra.mxu0 0.0
      %451 = vmatprep.subr.mxu0 0.0
      %452 = vmatpush1.msra.mxu0 0.0
      %453 = vmatprep.subr.mxu0 0.0
      %454 = vmatpush1.msra.mxu0 0.0
      %455 = vmatprep.subr.mxu0 0.0
      %456 = vmatpush1.msra.mxu0 0.0
      %457 = vmatprep.subr.mxu0 0.0
      %458 = vmatpush1.msra.mxu0 0.0
      %459 = vmatprep.subr.mxu0 0.0
      %460 = vmatpush1.msra.mxu0 0.0
      %461 = vmatprep.subr.mxu0 0.0
      %462 = vmatpush1.msra.mxu0 0.0
      %463 = vmatprep.subr.mxu0 0.0
      %464 = vmatpush1.msra.mxu0 0.0
      %465 = vmatprep.subr.mxu0 0.0
      %466 = vmatpush1.msra.mxu0 0.0
      %467 = vmatprep.subr.mxu0 0.0
      %468 = vmatpush1.msra.mxu0 0.0
      %469 = vmatprep.subr.mxu0 0.0
      %470 = vmatpush1.msra.mxu0 0.0
      %471 = vmatprep.subr.mxu0 0.0
      %472 = vmatpush1.msra.mxu0 0.0
      %473 = vmatprep.subr.mxu0 0.0
      %474 = vmatpush1.msra.mxu0 0.0
      %475 = vmatprep.subr.mxu0 0.0
      %476 = vmatpush1.msra.mxu0 0.0
      %477 = vmatprep.subr.mxu0 0.0
      %478 = vmatpush1.msra.mxu0 0.0
      %479 = vmatprep.subr.mxu0 0.0
      %480 = vmatpush1.msra.mxu0 0.0
      %481 = vmatprep.subr.mxu0 0.0
      %482 = vmatpush1.msra.mxu0 0.0
      %483 = vmatprep.subr.mxu0 0.0
      %484 = vmatpush1.msra.mxu0 0.0
      %485 = vmatprep.subr.mxu0 0.0
      %486 = vmatpush1.msra.mxu0 0.0
      %487 = vmatprep.subr.mxu0 0.0
      %488 = vmatpush1.msra.mxu0 0.0
      %489 = vmatprep.subr.mxu0 0.0
      %490 = vmatpush1.msra.mxu0 0.0
      %491 = vmatprep.subr.mxu0 0.0
      %492 = vmatpush1.msra.mxu0 0.0
      %493 = vmatprep.subr.mxu0 0.0
      %494 = vmatpush1.msra.mxu0 0.0
      %495 = vmatprep.subr.mxu0 0.0
      %496 = vmatpush1.msra.mxu0 0.0
      %497 = vmatprep.subr.mxu0 0.0
      %498 = vmatpush1.msra.mxu0 0.0
      %499 = vmatprep.mubr.f32.mxu0 0.0
      %500 = vmatmul.mubr.f32.gmra.mrb[0].mxu0 %v416
      %v501 = vpop.f32.mrb[0].mxu0
      %v502 = vadd.f32 0.0, %v501
      %v503 = vpop.f32.mrb[0].mxu0
      %v504 = vadd.f32 0.0, %v503
      %505 = vdwg.mxu0
      %506 = vmatprep.subr.mxu0 %v425
      %507 = vmatpush1.msra.mxu0 %v423
      %508 = vmatprep.subr.mxu0 0.0
      %509 = vmatpush1.msra.mxu0 0.0
      %510 = vmatprep.subr.mxu0 0.0
      %511 = vmatpush1.msra.mxu0 0.0
      %512 = vmatprep.subr.mxu0 0.0
      %513 = vmatpush1.msra.mxu0 0.0
      %514 = vmatprep.subr.mxu0 0.0
      %515 = vmatpush1.msra.mxu0 0.0
      %516 = vmatprep.subr.mxu0 0.0
      %517 = vmatpush1.msra.mxu0 0.0
      %518 = vmatprep.subr.mxu0 0.0
      %519 = vmatpush1.msra.mxu0 0.0
      %520 = vmatprep.subr.mxu0 0.0
      %521 = vmatpush1.msra.mxu0 0.0
      %522 = vmatprep.subr.mxu0 0.0
      %523 = vmatpush1.msra.mxu0 0.0
      %524 = vmatprep.subr.mxu0 0.0
      %525 = vmatpush1.msra.mxu0 0.0
      %526 = vmatprep.subr.mxu0 0.0
      %527 = vmatpush1.msra.mxu0 0.0
      %528 = vmatprep.subr.mxu0 0.0
      %529 = vmatpush1.msra.mxu0 0.0
      %530 = vmatprep.subr.mxu0 0.0
      %531 = vmatpush1.msra.mxu0 0.0
      %532 = vmatprep.subr.mxu0 0.0
      %533 = vmatpush1.msra.mxu0 0.0
      %534 = vmatprep.subr.mxu0 0.0
      %535 = vmatpush1.msra.mxu0 0.0
      %536 = vmatprep.subr.mxu0 0.0
      %537 = vmatpush1.msra.mxu0 0.0
      %538 = vmatprep.subr.mxu0 0.0
      %539 = vmatpush1.msra.mxu0 0.0
      %540 = vmatprep.subr.mxu0 0.0
      %541 = vmatpush1.msra.mxu0 0.0
      %542 = vmatprep.subr.mxu0 0.0
      %543 = vmatpush1.msra.mxu0 0.0
      %544 = vmatprep.subr.mxu0 0.0
      %545 = vmatpush1.msra.mxu0 0.0
      %546 = vmatprep.subr.mxu0 0.0
      %547 = vmatpush1.msra.mxu0 0.0
      %548 = vmatprep.subr.mxu0 0.0
      %549 = vmatpush1.msra.mxu0 0.0
      %550 = vmatprep.subr.mxu0 0.0
      %551 = vmatpush1.msra.mxu0 0.0
      %552 = vmatprep.subr.mxu0 0.0
      %553 = vmatpush1.msra.mxu0 0.0
      %554 = vmatprep.subr.mxu0 0.0
      %555 = vmatpush1.msra.mxu0 0.0
      %556 = vmatprep.subr.mxu0 0.0
      %557 = vmatpush1.msra.mxu0 0.0
      %558 = vmatprep.subr.mxu0 0.0
      %559 = vmatpush1.msra.mxu0 0.0
      %560 = vmatprep.subr.mxu0 0.0
      %561 = vmatpush1.msra.mxu0 0.0
      %562 = vmatprep.subr.mxu0 0.0
      %563 = vmatpush1.msra.mxu0 0.0
      %564 = vmatprep.subr.mxu0 0.0
      %565 = vmatpush1.msra.mxu0 0.0
      %566 = vmatprep.subr.mxu0 0.0
      %567 = vmatpush1.msra.mxu0 0.0
      %568 = vmatprep.subr.mxu0 0.0
      %569 = vmatpush1.msra.mxu0 0.0
      %570 = vmatprep.mubr.f32.mxu0 0.0
      %571 = vmatmul.mubr.f32.gmra.mrb[0].mxu0 %v416
      %v572 = vpop.f32.mrb[0].mxu0
      %v573 = vadd.f32 0.0, %v572
      %v574 = vpop.f32.mrb[0].mxu0
      %v575 = vadd.f32 0.0, %v574
      %576 = vdwg.mxu0
      %577 = vmatprep.subr.mxu0 %v429
      %578 = vmatpush1.msra.mxu0 %v427
      %579 = vmatprep.subr.mxu0 0.0
      %580 = vmatpush1.msra.mxu0 0.0
      %581 = vmatprep.subr.mxu0 0.0
      %582 = vmatpush1.msra.mxu0 0.0
      %583 = vmatprep.subr.mxu0 0.0
      %584 = vmatpush1.msra.mxu0 0.0
      %585 = vmatprep.subr.mxu0 0.0
      %586 = vmatpush1.msra.mxu0 0.0
      %587 = vmatprep.subr.mxu0 0.0
      %588 = vmatpush1.msra.mxu0 0.0
      %589 = vmatprep.subr.mxu0 0.0
      %590 = vmatpush1.msra.mxu0 0.0
      %591 = vmatprep.subr.mxu0 0.0
      %592 = vmatpush1.msra.mxu0 0.0
      %593 = vmatprep.subr.mxu0 0.0
      %594 = vmatpush1.msra.mxu0 0.0
      %595 = vmatprep.subr.mxu0 0.0
      %596 = vmatpush1.msra.mxu0 0.0
      %597 = vmatprep.subr.mxu0 0.0
      %598 = vmatpush1.msra.mxu0 0.0
      %599 = vmatprep.subr.mxu0 0.0
      %600 = vmatpush1.msra.mxu0 0.0
      %601 = vmatprep.subr.mxu0 0.0
      %602 = vmatpush1.msra.mxu0 0.0
      %603 = vmatprep.subr.mxu0 0.0
      %604 = vmatpush1.msra.mxu0 0.0
      %605 = vmatprep.subr.mxu0 0.0
      %606 = vmatpush1.msra.mxu0 0.0
      %607 = vmatprep.subr.mxu0 0.0
      %608 = vmatpush1.msra.mxu0 0.0
      %609 = vmatprep.subr.mxu0 0.0
      %610 = vmatpush1.msra.mxu0 0.0
      %611 = vmatprep.subr.mxu0 0.0
      %612 = vmatpush1.msra.mxu0 0.0
      %613 = vmatprep.subr.mxu0 0.0
      %614 = vmatpush1.msra.mxu0 0.0
      %615 = vmatprep.subr.mxu0 0.0
      %616 = vmatpush1.msra.mxu0 0.0
      %617 = vmatprep.subr.mxu0 0.0
      %618 = vmatpush1.msra.mxu0 0.0
      %619 = vmatprep.subr.mxu0 0.0
      %620 = vmatpush1.msra.mxu0 0.0
      %621 = vmatprep.subr.mxu0 0.0
      %622 = vmatpush1.msra.mxu0 0.0
      %623 = vmatprep.subr.mxu0 0.0
      %624 = vmatpush1.msra.mxu0 0.0
      %625 = vmatprep.subr.mxu0 0.0
      %626 = vmatpush1.msra.mxu0 0.0
      %627 = vmatprep.subr.mxu0 0.0
      %628 = vmatpush1.msra.mxu0 0.0
      %629 = vmatprep.subr.mxu0 0.0
      %630 = vmatpush1.msra.mxu0 0.0
      %631 = vmatprep.subr.mxu0 0.0
      %632 = vmatpush1.msra.mxu0 0.0
      %633 = vmatprep.subr.mxu0 0.0
      %634 = vmatpush1.msra.mxu0 0.0
      %635 = vmatprep.subr.mxu0 0.0
      %636 = vmatpush1.msra.mxu0 0.0
      %637 = vmatprep.subr.mxu0 0.0
      %638 = vmatpush1.msra.mxu0 0.0
      %639 = vmatprep.subr.mxu0 0.0
      %640 = vmatpush1.msra.mxu0 0.0
      %641 = vmatprep.mubr.f32.mxu0 0.0
      %642 = vmatmul.mubr.f32.gmra.mrb[0].mxu0 %v416
      %v643 = vpop.f32.mrb[0].mxu0
      %v644 = vadd.f32 0.0, %v643
      %v645 = vpop.f32.mrb[0].mxu0
      %v646 = vadd.f32 0.0, %v645
      %647 = vdwg.mxu0
      %648 = vmatprep.subr.mxu0 %v433
      %649 = vmatpush1.msra.mxu0 %v431
      %650 = vmatprep.subr.mxu0 0.0
      %651 = vmatpush1.msra.mxu0 0.0
      %652 = vmatprep.subr.mxu0 0.0
      %653 = vmatpush1.msra.mxu0 0.0
      %654 = vmatprep.subr.mxu0 0.0
      %655 = vmatpush1.msra.mxu0 0.0
      %656 = vmatprep.subr.mxu0 0.0
      %657 = vmatpush1.msra.mxu0 0.0
      %658 = vmatprep.subr.mxu0 0.0
      %659 = vmatpush1.msra.mxu0 0.0
      %660 = vmatprep.subr.mxu0 0.0
      %661 = vmatpush1.msra.mxu0 0.0
      %662 = vmatprep.subr.mxu0 0.0
      %663 = vmatpush1.msra.mxu0 0.0
      %664 = vmatprep.subr.mxu0 0.0
      %665 = vmatpush1.msra.mxu0 0.0
      %666 = vmatprep.subr.mxu0 0.0
      %667 = vmatpush1.msra.mxu0 0.0
      %668 = vmatprep.subr.mxu0 0.0
      %669 = vmatpush1.msra.mxu0 0.0
      %670 = vmatprep.subr.mxu0 0.0
      %671 = vmatpush1.msra.mxu0 0.0
      %672 = vmatprep.subr.mxu0 0.0
      %673 = vmatpush1.msra.mxu0 0.0
      %674 = vmatprep.subr.mxu0 0.0
      %675 = vmatpush1.msra.mxu0 0.0
      %676 = vmatprep.subr.mxu0 0.0
      %677 = vmatpush1.msra.mxu0 0.0
      %678 = vmatprep.subr.mxu0 0.0
      %679 = vmatpush1.msra.mxu0 0.0
      %680 = vmatprep.subr.mxu0 0.0
      %681 = vmatpush1.msra.mxu0 0.0
      %682 = vmatprep.subr.mxu0 0.0
      %683 = vmatpush1.msra.mxu0 0.0
      %684 = vmatprep.subr.mxu0 0.0
      %685 = vmatpush1.msra.mxu0 0.0
      %686 = vmatprep.subr.mxu0 0.0
      %687 = vmatpush1.msra.mxu0 0.0
      %688 = vmatprep.subr.mxu0 0.0
      %689 = vmatpush1.msra.mxu0 0.0
      %690 = vmatprep.subr.mxu0 0.0
      %691 = vmatpush1.msra.mxu0 0.0
      %692 = vmatprep.subr.mxu0 0.0
      %693 = vmatpush1.msra.mxu0 0.0
      %694 = vmatprep.subr.mxu0 0.0
      %695 = vmatpush1.msra.mxu0 0.0
      %696 = vmatprep.subr.mxu0 0.0
      %697 = vmatpush1.msra.mxu0 0.0
      %698 = vmatprep.subr.mxu0 0.0
      %699 = vmatpush1.msra.mxu0 0.0
      %700 = vmatprep.subr.mxu0 0.0
      %701 = vmatpush1.msra.mxu0 0.0
      %702 = vmatprep.subr.mxu0 0.0
      %703 = vmatpush1.msra.mxu0 0.0
      %704 = vmatprep.subr.mxu0 0.0
      %705 = vmatpush1.msra.mxu0 0.0
      %706 = vmatprep.subr.mxu0 0.0
      %707 = vmatpush1.msra.mxu0 0.0
      %708 = vmatprep.subr.mxu0 0.0
      %709 = vmatpush1.msra.mxu0 0.0
      %710 = vmatprep.subr.mxu0 0.0
      %711 = vmatpush1.msra.mxu0 0.0
      %712 = vmatprep.mubr.f32.mxu0 0.0
      %713 = vmatmul.mubr.f32.gmra.mrb[0].mxu0 %v416
      %v714 = vpop.f32.mrb[0].mxu0
      %v715 = vadd.f32 0.0, %v714
      %v716 = vpop.f32.mrb[0].mxu0
      %v717 = vadd.f32 0.0, %v716
      %718 = vdwg.mxu0
      %v723 = vcombine.high %v397, %v397
      %v724 = vcombine.high %v398, %v398
      %v725 = vcombine.high %v399, %v399
      %v726 = vcombine.high %v400, %v400
      %v728 = vsel %vm414, %v396, 0
      %v730 = vsel %vm418, %v397, 0
      %v732 = vsel %vm418, %v723, 0
      %v734 = vsel %vm418, %v398, 0
      %v736 = vsel %vm418, %v724, 0
      %v738 = vsel %vm418, %v399, 0
      %v740 = vsel %vm418, %v725, 0
      %v742 = vsel %vm418, %v400, 0
      %v744 = vsel %vm418, %v726, 0
      %746 = vmatprep.subr.mxu0 %v732
      %747 = vmatpush1.msra.mxu0 %v730
      %748 = vmatprep.subr.mxu0 0.0
      %749 = vmatpush1.msra.mxu0 0.0
      %750 = vmatprep.subr.mxu0 0.0
      %751 = vmatpush1.msra.mxu0 0.0
      %752 = vmatprep.subr.mxu0 0.0
      %753 = vmatpush1.msra.mxu0 0.0
      %754 = vmatprep.subr.mxu0 0.0
      %755 = vmatpush1.msra.mxu0 0.0
      %756 = vmatprep.subr.mxu0 0.0
      %757 = vmatpush1.msra.mxu0 0.0
      %758 = vmatprep.subr.mxu0 0.0
      %759 = vmatpush1.msra.mxu0 0.0
      %760 = vmatprep.subr.mxu0 0.0
      %761 = vmatpush1.msra.mxu0 0.0
      %762 = vmatprep.subr.mxu0 0.0
      %763 = vmatpush1.msra.mxu0 0.0
      %764 = vmatprep.subr.mxu0 0.0
      %765 = vmatpush1.msra.mxu0 0.0
      %766 = vmatprep.subr.mxu0 0.0
      %767 = vmatpush1.msra.mxu0 0.0
      %768 = vmatprep.subr.mxu0 0.0
      %769 = vmatpush1.msra.mxu0 0.0
      %770 = vmatprep.subr.mxu0 0.0
      %771 = vmatpush1.msra.mxu0 0.0
      %772 = vmatprep.subr.mxu0 0.0
      %773 = vmatpush1.msra.mxu0 0.0
      %774 = vmatprep.subr.mxu0 0.0
      %775 = vmatpush1.msra.mxu0 0.0
      %776 = vmatprep.subr.mxu0 0.0
      %777 = vmatpush1.msra.mxu0 0.0
      %778 = vmatprep.subr.mxu0 0.0
      %779 = vmatpush1.msra.mxu0 0.0
      %780 = vmatprep.subr.mxu0 0.0
      %781 = vmatpush1.msra.mxu0 0.0
      %782 = vmatprep.subr.mxu0 0.0
      %783 = vmatpush1.msra.mxu0 0.0
      %784 = vmatprep.subr.mxu0 0.0
      %785 = vmatpush1.msra.mxu0 0.0
      %786 = vmatprep.subr.mxu0 0.0
      %787 = vmatpush1.msra.mxu0 0.0
      %788 = vmatprep.subr.mxu0 0.0
      %789 = vmatpush1.msra.mxu0 0.0
      %790 = vmatprep.subr.mxu0 0.0
      %791 = vmatpush1.msra.mxu0 0.0
      %792 = vmatprep.subr.mxu0 0.0
      %793 = vmatpush1.msra.mxu0 0.0
      %794 = vmatprep.subr.mxu0 0.0
      %795 = vmatpush1.msra.mxu0 0.0
      %796 = vmatprep.subr.mxu0 0.0
      %797 = vmatpush1.msra.mxu0 0.0
      %798 = vmatprep.subr.mxu0 0.0
      %799 = vmatpush1.msra.mxu0 0.0
      %800 = vmatprep.subr.mxu0 0.0
      %801 = vmatpush1.msra.mxu0 0.0
      %802 = vmatprep.subr.mxu0 0.0
      %803 = vmatpush1.msra.mxu0 0.0
      %804 = vmatprep.subr.mxu0 0.0
      %805 = vmatpush1.msra.mxu0 0.0
      %806 = vmatprep.subr.mxu0 0.0
      %807 = vmatpush1.msra.mxu0 0.0
      %808 = vmatprep.subr.mxu0 0.0
      %809 = vmatpush1.msra.mxu0 0.0
      %810 = vmatprep.mubr.f32.mxu0 0.0
      %811 = vmatmul.mubr.f32.gmra.mrb[0].mxu0 %v728
      %v812 = vpop.f32.mrb[0].mxu0
      %v813 = vadd.f32 %v502, %v812
      %v814 = vpop.f32.mrb[0].mxu0
      %v815 = vadd.f32 %v504, %v814
      %816 = vdwg.mxu0
      %817 = vmatprep.subr.mxu0 %v736
      %818 = vmatpush1.msra.mxu0 %v734
      %819 = vmatprep.subr.mxu0 0.0
      %820 = vmatpush1.msra.mxu0 0.0
      %821 = vmatprep.subr.mxu0 0.0
      %822 = vmatpush1.msra.mxu0 0.0
      %823 = vmatprep.subr.mxu0 0.0
      %824 = vmatpush1.msra.mxu0 0.0
      %825 = vmatprep.subr.mxu0 0.0
      %826 = vmatpush1.msra.mxu0 0.0
      %827 = vmatprep.subr.mxu0 0.0
      %828 = vmatpush1.msra.mxu0 0.0
      %829 = vmatprep.subr.mxu0 0.0
      %830 = vmatpush1.msra.mxu0 0.0
      %831 = vmatprep.subr.mxu0 0.0
      %832 = vmatpush1.msra.mxu0 0.0
      %833 = vmatprep.subr.mxu0 0.0
      %834 = vmatpush1.msra.mxu0 0.0
      %835 = vmatprep.subr.mxu0 0.0
      %836 = vmatpush1.msra.mxu0 0.0
      %837 = vmatprep.subr.mxu0 0.0
      %838 = vmatpush1.msra.mxu0 0.0
      %839 = vmatprep.subr.mxu0 0.0
      %840 = vmatpush1.msra.mxu0 0.0
      %841 = vmatprep.subr.mxu0 0.0
      %842 = vmatpush1.msra.mxu0 0.0
      %843 = vmatprep.subr.mxu0 0.0
      %844 = vmatpush1.msra.mxu0 0.0
      %845 = vmatprep.subr.mxu0 0.0
      %846 = vmatpush1.msra.mxu0 0.0
      %847 = vmatprep.subr.mxu0 0.0
      %848 = vmatpush1.msra.mxu0 0.0
      %849 = vmatprep.subr.mxu0 0.0
      %850 = vmatpush1.msra.mxu0 0.0
      %851 = vmatprep.subr.mxu0 0.0
      %852 = vmatpush1.msra.mxu0 0.0
      %853 = vmatprep.subr.mxu0 0.0
      %854 = vmatpush1.msra.mxu0 0.0
      %855 = vmatprep.subr.mxu0 0.0
      %856 = vmatpush1.msra.mxu0 0.0
      %857 = vmatprep.subr.mxu0 0.0
      %858 = vmatpush1.msra.mxu0 0.0
      %859 = vmatprep.subr.mxu0 0.0
      %860 = vmatpush1.msra.mxu0 0.0
      %861 = vmatprep.subr.mxu0 0.0
      %862 = vmatpush1.msra.mxu0 0.0
      %863 = vmatprep.subr.mxu0 0.0
      %864 = vmatpush1.msra.mxu0 0.0
      %865 = vmatprep.subr.mxu0 0.0
      %866 = vmatpush1.msra.mxu0 0.0
      %867 = vmatprep.subr.mxu0 0.0
      %868 = vmatpush1.msra.mxu0 0.0
      %869 = vmatprep.subr.mxu0 0.0
      %870 = vmatpush1.msra.mxu0 0.0
      %871 = vmatprep.subr.mxu0 0.0
      %872 = vmatpush1.msra.mxu0 0.0
      %873 = vmatprep.subr.mxu0 0.0
      %874 = vmatpush1.msra.mxu0 0.0
      %875 = vmatprep.subr.mxu0 0.0
      %876 = vmatpush1.msra.mxu0 0.0
      %877 = vmatprep.subr.mxu0 0.0
      %878 = vmatpush1.msra.mxu0 0.0
      %879 = vmatprep.subr.mxu0 0.0
      %880 = vmatpush1.msra.mxu0 0.0
      %881 = vmatprep.mubr.f32.mxu0 0.0
      %882 = vmatmul.mubr.f32.gmra.mrb[0].mxu0 %v728
      %v883 = vpop.f32.mrb[0].mxu0
      %v884 = vadd.f32 %v573, %v883
      %v885 = vpop.f32.mrb[0].mxu0
      %v886 = vadd.f32 %v575, %v885
      %887 = vdwg.mxu0
      %888 = vmatprep.subr.mxu0 %v740
      %889 = vmatpush1.msra.mxu0 %v738
      %890 = vmatprep.subr.mxu0 0.0
      %891 = vmatpush1.msra.mxu0 0.0
      %892 = vmatprep.subr.mxu0 0.0
      %893 = vmatpush1.msra.mxu0 0.0
      %894 = vmatprep.subr.mxu0 0.0
      %895 = vmatpush1.msra.mxu0 0.0
      %896 = vmatprep.subr.mxu0 0.0
      %897 = vmatpush1.msra.mxu0 0.0
      %898 = vmatprep.subr.mxu0 0.0
      %899 = vmatpush1.msra.mxu0 0.0
      %900 = vmatprep.subr.mxu0 0.0
      %901 = vmatpush1.msra.mxu0 0.0
      %902 = vmatprep.subr.mxu0 0.0
      %903 = vmatpush1.msra.mxu0 0.0
      %904 = vmatprep.subr.mxu0 0.0
      %905 = vmatpush1.msra.mxu0 0.0
      %906 = vmatprep.subr.mxu0 0.0
      %907 = vmatpush1.msra.mxu0 0.0
      %908 = vmatprep.subr.mxu0 0.0
      %909 = vmatpush1.msra.mxu0 0.0
      %910 = vmatprep.subr.mxu0 0.0
      %911 = vmatpush1.msra.mxu0 0.0
      %912 = vmatprep.subr.mxu0 0.0
      %913 = vmatpush1.msra.mxu0 0.0
      %914 = vmatprep.subr.mxu0 0.0
      %915 = vmatpush1.msra.mxu0 0.0
      %916 = vmatprep.subr.mxu0 0.0
      %917 = vmatpush1.msra.mxu0 0.0
      %918 = vmatprep.subr.mxu0 0.0
      %919 = vmatpush1.msra.mxu0 0.0
      %920 = vmatprep.subr.mxu0 0.0
      %921 = vmatpush1.msra.mxu0 0.0
      %922 = vmatprep.subr.mxu0 0.0
      %923 = vmatpush1.msra.mxu0 0.0
      %924 = vmatprep.subr.mxu0 0.0
      %925 = vmatpush1.msra.mxu0 0.0
      %926 = vmatprep.subr.mxu0 0.0
      %927 = vmatpush1.msra.mxu0 0.0
      %928 = vmatprep.subr.mxu0 0.0
      %929 = vmatpush1.msra.mxu0 0.0
      %930 = vmatprep.subr.mxu0 0.0
      %931 = vmatpush1.msra.mxu0 0.0
      %932 = vmatprep.subr.mxu0 0.0
      %933 = vmatpush1.msra.mxu0 0.0
      %934 = vmatprep.subr.mxu0 0.0
      %935 = vmatpush1.msra.mxu0 0.0
      %936 = vmatprep.subr.mxu0 0.0
      %937 = vmatpush1.msra.mxu0 0.0
      %938 = vmatprep.subr.mxu0 0.0
      %939 = vmatpush1.msra.mxu0 0.0
      %940 = vmatprep.subr.mxu0 0.0
      %941 = vmatpush1.msra.mxu0 0.0
      %942 = vmatprep.subr.mxu0 0.0
      %943 = vmatpush1.msra.mxu0 0.0
      %944 = vmatprep.subr.mxu0 0.0
      %945 = vmatpush1.msra.mxu0 0.0
      %946 = vmatprep.subr.mxu0 0.0
      %947 = vmatpush1.msra.mxu0 0.0
      %948 = vmatprep.subr.mxu0 0.0
      %949 = vmatpush1.msra.mxu0 0.0
      %950 = vmatprep.subr.mxu0 0.0
      %951 = vmatpush1.msra.mxu0 0.0
      %952 = vmatprep.mubr.f32.mxu0 0.0
      %953 = vmatmul.mubr.f32.gmra.mrb[0].mxu0 %v728
      %v954 = vpop.f32.mrb[0].mxu0
      %v955 = vadd.f32 %v644, %v954
      %v956 = vpop.f32.mrb[0].mxu0
      %v957 = vadd.f32 %v646, %v956
      %958 = vdwg.mxu0
      %959 = vmatprep.subr.mxu0 %v744
      %960 = vmatpush1.msra.mxu0 %v742
      %961 = vmatprep.subr.mxu0 0.0
      %962 = vmatpush1.msra.mxu0 0.0
      %963 = vmatprep.subr.mxu0 0.0
      %964 = vmatpush1.msra.mxu0 0.0
      %965 = vmatprep.subr.mxu0 0.0
      %966 = vmatpush1.msra.mxu0 0.0
      %967 = vmatprep.subr.mxu0 0.0
      %968 = vmatpush1.msra.mxu0 0.0
      %969 = vmatprep.subr.mxu0 0.0
      %970 = vmatpush1.msra.mxu0 0.0
      %971 = vmatprep.subr.mxu0 0.0
      %972 = vmatpush1.msra.mxu0 0.0
      %973 = vmatprep.subr.mxu0 0.0
      %974 = vmatpush1.msra.mxu0 0.0
      %975 = vmatprep.subr.mxu0 0.0
      %976 = vmatpush1.msra.mxu0 0.0
      %977 = vmatprep.subr.mxu0 0.0
      %978 = vmatpush1.msra.mxu0 0.0
      %979 = vmatprep.subr.mxu0 0.0
      %980 = vmatpush1.msra.mxu0 0.0
      %981 = vmatprep.subr.mxu0 0.0
      %982 = vmatpush1.msra.mxu0 0.0
      %983 = vmatprep.subr.mxu0 0.0
      %984 = vmatpush1.msra.mxu0 0.0
      %985 = vmatprep.subr.mxu0 0.0
      %986 = vmatpush1.msra.mxu0 0.0
      %987 = vmatprep.subr.mxu0 0.0
      %988 = vmatpush1.msra.mxu0 0.0
      %989 = vmatprep.subr.mxu0 0.0
      %990 = vmatpush1.msra.mxu0 0.0
      %991 = vmatprep.subr.mxu0 0.0
      %992 = vmatpush1.msra.mxu0 0.0
      %993 = vmatprep.subr.mxu0 0.0
      %994 = vmatpush1.msra.mxu0 0.0
      %995 = vmatprep.subr.mxu0 0.0
      %996 = vmatpush1.msra.mxu0 0.0
      %997 = vmatprep.subr.mxu0 0.0
      %998 = vmatpush1.msra.mxu0 0.0
      %999 = vmatprep.subr.mxu0 0.0
      %1000 = vmatpush1.msra.mxu0 0.0
      %1001 = vmatprep.subr.mxu0 0.0
      %1002 = vmatpush1.msra.mxu0 0.0
      %1003 = vmatprep.subr.mxu0 0.0
      %1004 = vmatpush1.msra.mxu0 0.0
      %1005 = vmatprep.subr.mxu0 0.0
      %1006 = vmatpush1.msra.mxu0 0.0
      %1007 = vmatprep.subr.mxu0 0.0
      %1008 = vmatpush1.msra.mxu0 0.0
      %1009 = vmatprep.subr.mxu0 0.0
      %1010 = vmatpush1.msra.mxu0 0.0
      %1011 = vmatprep.subr.mxu0 0.0
      %1012 = vmatpush1.msra.mxu0 0.0
      %1013 = vmatprep.subr.mxu0 0.0
      %1014 = vmatpush1.msra.mxu0 0.0
      %1015 = vmatprep.subr.mxu0 0.0
      %1016 = vmatpush1.msra.mxu0 0.0
      %1017 = vmatprep.subr.mxu0 0.0
      %1018 = vmatpush1.msra.mxu0 0.0
      %1019 = vmatprep.subr.mxu0 0.0
      %1020 = vmatpush1.msra.mxu0 0.0
      %1021 = vmatprep.subr.mxu0 0.0
      %1022 = vmatpush1.msra.mxu0 0.0
      %1023 = vmatprep.mubr.f32.mxu0 0.0
      %1024 = vmatmul.mubr.f32.gmra.mrb[0].mxu0 %v728
      %v1025 = vpop.f32.mrb[0].mxu0
      %v1026 = vadd.f32 %v715, %v1025
      %v1027 = vpop.f32.mrb[0].mxu0
      %v1028 = vadd.f32 %v717, %v1027
      %1029 = vdwg.mxu0
      %v1030 = vld [vmem:[%s4] sm:$0xff]
      %1032 = vset.pattern.permute.xlu0 0
      %1033 = vperm.xlu0 %1032, %v1030
      %v1034 = vpop.permute.xlu0 %1033
      %v1036 = vadd.f32 %v813, %v1034
      %v1037 = vadd.f32 %v815, %v1034
      %v1038 = vadd.f32 %v884, %v1034
      %v1039 = vadd.f32 %v886, %v1034
      %v1040 = vadd.f32 %v955, %v1034
      %v1041 = vadd.f32 %v957, %v1034
      %v1042 = vadd.f32 %v1026, %v1034
      %v1043 = vadd.f32 %v1028, %v1034
      %vm1044 = vcmp.ge.f32.partialorder %v1036, 0.0
      %vm1045 = vcmp.ge.f32.partialorder %v1037, 0.0
      %vm1046 = vcmp.ge.f32.partialorder %v1038, 0.0
      %vm1047 = vcmp.ge.f32.partialorder %v1039, 0.0
      %vm1048 = vcmp.ge.f32.partialorder %v1040, 0.0
      %vm1049 = vcmp.ge.f32.partialorder %v1041, 0.0
      %vm1050 = vcmp.ge.f32.partialorder %v1042, 0.0
      %vm1051 = vcmp.ge.f32.partialorder %v1043, 0.0
      %v1052 = vmul.f32 %v1036, 0.01
      %v1053 = vmul.f32 %v1037, 0.01
      %v1054 = vmul.f32 %v1038, 0.01
      %v1055 = vmul.f32 %v1039, 0.01
      %v1056 = vmul.f32 %v1040, 0.01
      %v1057 = vmul.f32 %v1041, 0.01
      %v1058 = vmul.f32 %v1042, 0.01
      %v1059 = vmul.f32 %v1043, 0.01
      %v1060 = vsel %vm1044, %v1036, %v1052
      %v1061 = vsel %vm1045, %v1037, %v1053
      %v1062 = vsel %vm1046, %v1038, %v1054
      %v1063 = vsel %vm1047, %v1039, %v1055
      %v1064 = vsel %vm1048, %v1040, %v1056
      %v1065 = vsel %vm1049, %v1041, %v1057
      %v1066 = vsel %vm1050, %v1042, %v1058
      %v1067 = vsel %vm1051, %v1043, %v1059
      %v1068 = vld [vmem:[%s5] sm:$0xff]
      %1070 = vset.pattern.permute.xlu0 0
      %1071 = vperm.xlu0 %1070, %v1068
      %v1072 = vpop.permute.xlu0 %1071
      %v1074 = vmul.f32 %v1072, %v1060
      %v1075 = vmul.f32 %v1072, %v1061
      %v1076 = vmul.f32 %v1072, %v1062
      %v1077 = vmul.f32 %v1072, %v1063
      %v1078 = vmul.f32 %v1072, %v1064
      %v1079 = vmul.f32 %v1072, %v1065
      %v1080 = vmul.f32 %v1072, %v1066
      %v1081 = vmul.f32 %v1072, %v1067
      %v1082 = vrot.slane %v1074, 4
      %v1083 = vadd.f32 %v1074, %v1082
      %v1084 = vrot.slane %v1083, 2
      %v1085 = vadd.f32 %v1083, %v1084
      %v1086 = vrot.slane %v1085, 1
      %v1087 = vadd.f32 %v1085, %v1086
      %v1088 = vrot.slane %v1075, 4
      %v1089 = vadd.f32 %v1075, %v1088
      %v1090 = vrot.slane %v1089, 2
      %v1091 = vadd.f32 %v1089, %v1090
      %v1092 = vrot.slane %v1091, 1
      %v1093 = vadd.f32 %v1091, %v1092
      %v1094 = vrot.slane %v1076, 4
      %v1095 = vadd.f32 %v1076, %v1094
      %v1096 = vrot.slane %v1095, 2
      %v1097 = vadd.f32 %v1095, %v1096
      %v1098 = vrot.slane %v1097, 1
      %v1099 = vadd.f32 %v1097, %v1098
      %v1100 = vrot.slane %v1077, 4
      %v1101 = vadd.f32 %v1077, %v1100
      %v1102 = vrot.slane %v1101, 2
      %v1103 = vadd.f32 %v1101, %v1102
      %v1104 = vrot.slane %v1103, 1
      %v1105 = vadd.f32 %v1103, %v1104
      %v1106 = vrot.slane %v1078, 4
      %v1107 = vadd.f32 %v1078, %v1106
      %v1108 = vrot.slane %v1107, 2
      %v1109 = vadd.f32 %v1107, %v1108
      %v1110 = vrot.slane %v1109, 1
      %v1111 = vadd.f32 %v1109, %v1110
      %v1112 = vrot.slane %v1079, 4
      %v1113 = vadd.f32 %v1079, %v1112
      %v1114 = vrot.slane %v1113, 2
      %v1115 = vadd.f32 %v1113, %v1114
      %v1116 = vrot.slane %v1115, 1
      %v1117 = vadd.f32 %v1115, %v1116
      %v1118 = vrot.slane %v1080, 4
      %v1119 = vadd.f32 %v1080, %v1118
      %v1120 = vrot.slane %v1119, 2
      %v1121 = vadd.f32 %v1119, %v1120
      %v1122 = vrot.slane %v1121, 1
      %v1123 = vadd.f32 %v1121, %v1122
      %v1124 = vrot.slane %v1081, 4
      %v1125 = vadd.f32 %v1081, %v1124
      %v1126 = vrot.slane %v1125, 2
      %v1127 = vadd.f32 %v1125, %v1126
      %v1128 = vrot.slane %v1127, 1
      %v1129 = vadd.f32 %v1127, %v1128
      %v1130 = vld [vmem:[#allocation2] sm:$0x1]
      %1132 = vset.pattern.permute.xlu0 0
      %1133 = vperm.xlu0 %1132, %v1130
      %v1134 = vpop.permute.xlu0 %1133
      %v1136 = vlaneseq
      %v1137 = vshrl.u32 %v1136, 7
      %v1138 = vsub.s32 0, %v1137
      %v1139 = vrot.slane %v1134, %v1138
      %v1140 = vadd.f32 %v1087, %v1139
      %v1141 = vadd.f32 %v1093, %v1139
      %v1142 = vadd.f32 %v1099, %v1139
      %v1143 = vadd.f32 %v1105, %v1139
      %v1144 = vadd.f32 %v1111, %v1139
      %v1145 = vadd.f32 %v1117, %v1139
      %v1146 = vadd.f32 %v1123, %v1139
      %v1147 = vadd.f32 %v1129, %v1139
      %v1156 = vcombine.low %v1140, %v1141
      %v1157 = vcombine.low %v1142, %v1143
      %v1158 = vcombine.low %v1144, %v1145
      %v1159 = vcombine.low %v1146, %v1147
      %v1161 = vunpack.c.l.s4 1966171168
      %v1162 = vunpack.c.0.s8 %v1161
      %v1163 = vlaneseq
      %v1164 = vshrl.u32 %v1163, 7
      %v1165 = vsub.s32 %v1162, %v1164
      %v1166 = vrot.slane %v1156, %v1165
      %v1168 = vunpack.c.l.s4 1966171168
      %v1169 = vunpack.c.0.s8 %v1168
      %v1170 = vlaneseq
      %v1171 = vshrl.u32 %v1170, 7
      %v1172 = vsub.s32 %v1169, %v1171
      %v1173 = vrot.slane %v1157, %v1172
      %v1175 = vunpack.c.l.s4 1966171168
      %v1176 = vunpack.c.0.s8 %v1175
      %v1177 = vlaneseq
      %v1178 = vshrl.u32 %v1177, 7
      %v1179 = vsub.s32 %v1176, %v1178
      %v1180 = vrot.slane %v1158, %v1179
      %v1182 = vunpack.c.l.s4 1966171168
      %v1183 = vunpack.c.0.s8 %v1182
      %v1184 = vlaneseq
      %v1185 = vshrl.u32 %v1184, 7
      %v1186 = vsub.s32 %v1183, %v1185
      %v1187 = vrot.slane %v1159, %v1186
      %v1188 = vcombine.low %v1166, %v1173
      %v1189 = vcombine.low %v1180, %v1187
      %v1191 = vunpack.c.l.s4 1966171168
      %v1192 = vunpack.c.0.s8 %v1191
      %v1193 = vlaneseq
      %v1194 = vshrl.u32 %v1193, 7
      %v1195 = vsub.s32 %v1192, %v1194
      %v1196 = vrot.slane %v1188, %v1195
      %v1198 = vunpack.c.l.s4 1966171168
      %v1199 = vunpack.c.0.s8 %v1198
      %v1200 = vlaneseq
      %v1201 = vshrl.u32 %v1200, 7
      %v1202 = vsub.s32 %v1199, %v1201
      %v1203 = vrot.slane %v1189, %v1202
      %v1204 = vcombine.low %v1196, %v1203
      %1206 = vst [vmem:[%s385] sm:$0xff] %v1204
      %v1207 = vlaneseq
      %v1208 = vand.u32 %v1207, 127
      %v1209 = vadd.s32 %v1208, 128
      %v1210 = vadd.s32 %v1208, 256
      %v1211 = vadd.s32 %v1208, 384
      %v1212 = vadd.s32 %v1208, 512
      %v1213 = vadd.s32 %v1208, 640
      %v1214 = vadd.s32 %v1208, 768
      %v1215 = vadd.s32 %v1208, 896
      %s1216 = smul.u32 %s27, 1024
      %v1217 = vstv %s1216
      %v1218 = vadd.s32 %v1208, %v1217
      %v1219 = vadd.s32 %v1209, %v1217
      %v1220 = vadd.s32 %v1210, %v1217
      %v1221 = vadd.s32 %v1211, %v1217
      %v1222 = vadd.s32 %v1212, %v1217
      %v1223 = vadd.s32 %v1213, %v1217
      %v1224 = vadd.s32 %v1214, %v1217
      %v1225 = vadd.s32 %v1215, %v1217
      %vm1226 = vcmp.lt.s32.totalorder %v1218, 1000
      %vm1227 = vcmp.lt.s32.totalorder %v1219, 1000
      %vm1228 = vcmp.lt.s32.totalorder %v1220, 1000
      %vm1229 = vcmp.lt.s32.totalorder %v1221, 1000
      %vm1230 = vcmp.lt.s32.totalorder %v1222, 1000
      %vm1231 = vcmp.lt.s32.totalorder %v1223, 1000
      %vm1232 = vcmp.lt.s32.totalorder %v1224, 1000
      %vm1233 = vcmp.lt.s32.totalorder %v1225, 1000
      %v1234 = vsel %vm1226, %v1140, 0.0
      %v1235 = vsel %vm1227, %v1141, 0.0
      %v1236 = vsel %vm1228, %v1142, 0.0
      %v1237 = vsel %vm1229, %v1143, 0.0
      %v1238 = vsel %vm1230, %v1144, 0.0
      %v1239 = vsel %vm1231, %v1145, 0.0
      %v1240 = vsel %vm1232, %v1146, 0.0
      %v1241 = vsel %vm1233, %v1147, 0.0
      %v1242 = vld [vmem:[%s389] sm:$0x1]
      %v1243 = vadd.f32 %v1234, %v1235
      %v1244 = vadd.f32 %v1243, %v1236
      %v1245 = vadd.f32 %v1244, %v1237
      %v1246 = vadd.f32 %v1245, %v1238
      %v1247 = vadd.f32 %v1246, %v1239
      %v1248 = vadd.f32 %v1247, %v1240
      %v1249 = vadd.f32 %v1248, %v1241
      %1250 = vadd.xlane.f32.xlu0 %v1249
      %v1251 = vpop.xlane.xlu0 %1250
      %v1252 = vmul.f32 %v1234, %v1234
      %v1253 = vmul.f32 %v1235, %v1235
      %v1254 = vmul.f32 %v1236, %v1236
      %v1255 = vmul.f32 %v1237, %v1237
      %v1256 = vmul.f32 %v1238, %v1238
      %v1257 = vmul.f32 %v1239, %v1239
      %v1258 = vmul.f32 %v1240, %v1240
      %v1259 = vmul.f32 %v1241, %v1241
      %v1260 = vadd.f32 %v1252, %v1253
      %v1261 = vadd.f32 %v1260, %v1254
      %v1262 = vadd.f32 %v1261, %v1255
      %v1263 = vadd.f32 %v1262, %v1256
      %v1264 = vadd.f32 %v1263, %v1257
      %v1265 = vadd.f32 %v1264, %v1258
      %v1266 = vadd.f32 %v1265, %v1259
      %1267 = vadd.xlane.f32.xlu0 %v1266
      %v1268 = vpop.xlane.xlu0 %1267
      %vm1269 = vcmask 7168
      %v1270 = vsel %vm1269, %v1251, %v1268
      %v1271 = vadd.f32 %v1242, %v1270
      %vm1272 = vcmask 8192
      %1273 = vst.msk [vmem:[%s389] sm:$0x1] %vm1272, %v1271
      %s1274 = smul.u32 8, %s27
      %p1275 = scmp.lt.s32.totalorder %s26, 1
      %s1276 = scalar_select %p1275, %s26, 1
      %p1277 = scmp.lt.s32.totalorder %s1274, 7
      %s1278 = scalar_select %p1277, %s1274, 7
      %s1279 = smul.addr %s1276, 8
      %s1280 = sadd.s32 %s1278, %s1279
      %s1281 = scalar_lea.vmem %s7, %s1280
      %p1282 = scmp.lt.s32.totalorder %s26, 1
      %s1283 = scalar_select %p1282, %s26, 1
      %s1284 = scalar_lea.vmem %s8, %s1283
      // Predicated region
      $region53: #{attention_block_forward.4} parent=47 // pred_check
        %p1285 = pneg %p215
      $region54: #{attention_block_forward.4} parent=47 // pred_check_branch
        %1287 = sbr.rel (%p1285) target = $region56
      $region55: #{attention_block_forward.4} parent=47 // pred_region
        %s1288 = smul.u32 8, %s27
      $region56: #{attention_block_forward.4} parent=47 // pred_fallthru
        _
      // Predicated region
      $region57: #{attention_block_forward.4} parent=47 // pred_check
        %p1289 = pneg %p241
      $region58: #{attention_block_forward.4} parent=47 // pred_check_branch
        %1291 = sbr.rel (%p1289) target = $region60
      $region59: #{attention_block_forward.4} parent=47 // pred_region
        _
      $region60: #{attention_block_forward.4} parent=47 // pred_fallthru
        _
    $region48: #{attention_block_forward.4} parent=5 // pred_fallthru
      _
    %p1292 = scmp.le.s32.totalorder 2, %s17
    // Predicated region
    $region61: #{attention_block_forward.4} parent=5 // pred_check
      %p1293 = pneg %p1292
    $region62: #{attention_block_forward.4} parent=5 // pred_check_branch
      %1295 = sbr.rel (%p1293) target = $region64
    $region63: #{attention_block_forward.4} parent=5 // pred_region
      %s1296 = ssub.s32 %s17, 2
      // Predicated region
      $region65: #{attention_block_forward.4} parent=63 // pred_check
        %p1297 = pneg %p221
      $region66: #{attention_block_forward.4} parent=63 // pred_check_branch
        %1299 = sbr.rel (%p1297) target = $region68
      $region67: #{attention_block_forward.4} parent=63 // pred_region
        %s1300 = smul.u32 8, %s29
        %p1301 = scmp.lt.s32.totalorder %s28, 1
        %s1302 = scalar_select %p1301, %s28, 1
        %p1303 = scmp.lt.s32.totalorder %s1300, 7
        %s1304 = scalar_select %p1303, %s1300, 7
        %s1305 = smul.addr %s1302, 8
        %s1306 = sadd.s32 %s1304, %s1305
        %s1307 = scalar_lea.vmem %s7, %s1306
      $region68: #{attention_block_forward.4} parent=63 // pred_fallthru
        _
      // Predicated region
      $region69: #{attention_block_forward.4} parent=63 // pred_check
        %p1308 = pneg %p247
      $region70: #{attention_block_forward.4} parent=63 // pred_check_branch
        %1310 = sbr.rel (%p1308) target = $region72
      $region71: #{attention_block_forward.4} parent=63 // pred_region
        %p1311 = scmp.lt.s32.totalorder %s28, 1
        %s1312 = scalar_select %p1311, %s28, 1
        %s1313 = scalar_lea.vmem %s8, %s1312
      $region72: #{attention_block_forward.4} parent=63 // pred_fallthru
        _
    $region64: #{attention_block_forward.4} parent=5 // pred_fallthru
      _
  $region6: #{attention_block_forward.4} parent=0 // loop_footer
    %s21 = sadd.s32 1, %s17
  $region7: #{attention_block_forward.4} parent=0 // loop_footer_branch
    %16 = sbr.rel target = $region3
  $region8: #{attention_block_forward.4} parent=0 // loop_exit
    _

</llo_original>
